<compile_context>
chip_gen: v7x
topology: tpu7x:2x2x1
jax: 0.10.0
libtpu: 0.0.40
codegen_flags: <defaults>
</compile_context>

<pallas_src>
import functools

import jax
import jax.numpy as jnp
import numpy as np
from jax.experimental import pallas as pl
from jax.experimental.pallas import tpu as pltpu


def _gru_kernel(x_ref,                                   # (T*B, I)   flattened input
                w0_ih_ref, w0_hh_ref, b0_ih_ref, b0_hh_ref,   # layer 0: (I,3H),(H,3H),(1,3H),(1,3H)
                w1p_ref, b1_rz_ref, b1_in_ref, b1_hn_ref,     # layer 1 packed: (2H,4H),(1,2H),(1,H),(1,H)
                out_ref,                                  # (B, H)
                *, seq_len, batch):
    T, B = seq_len, batch
    H = w0_hh_ref.shape[0]

    # ---- Hoisted layer-0 input projection: one MXU pass for all timesteps ----
    gi0_all = (jnp.dot(x_ref[...], w0_ih_ref[...],
                       preferred_element_type=jnp.float32)
               + b0_ih_ref[...])                          # (T*B, 3H), includes b_ih0

    # ---- Hoist all remaining weights/biases out of the time loop ----
    w0_hh = w0_hh_ref[...]      # (H, 3H)
    b0_hh = b0_hh_ref[...]      # (1, 3H)
    w1p = w1p_ref[...]          # (2H, 4H)  [[Wih1_r|Wih1_z|Wih1_n|0],[Whh1_r|Whh1_z|0|Whh1_n]]
    b1_rz = b1_rz_ref[...]      # (1, 2H)   bih1[:2H] + bhh1[:2H]
    b1_in = b1_in_ref[...]      # (1, H)    bih1[2H:]
    b1_hn = b1_hn_ref[...]      # (1, H)    bhh1[2H:]

    h0 = jnp.zeros((B, H), jnp.float32)
    h1 = jnp.zeros((B, H), jnp.float32)

    # Fully-unrolled static time loop: hidden states stay register-resident, and the
    # scheduler can overlap layer-1 of step t with layer-0 of step t+1.
    for t in range(T):
        # ---------------- layer 0 (recurrence matmul only; input proj was hoisted) --------------
        gi0 = gi0_all[t * B:(t + 1) * B, :]                                     # (B, 3H)
        gh0 = jnp.dot(h0, w0_hh, preferred_element_type=jnp.float32) + b0_hh    # (B, 3H)
        r0 = jax.nn.sigmoid(gi0[:, 0:H] + gh0[:, 0:H])
        z0 = jax.nn.sigmoid(gi0[:, H:2 * H] + gh0[:, H:2 * H])
        n0 = jnp.tanh(gi0[:, 2 * H:3 * H] + r0 * gh0[:, 2 * H:3 * H])
        h0 = (1.0 - z0) * n0 + z0 * h0

        # ---------------- layer 1: single packed 4H(=128)-lane MXU pass --------------------------
        hcat = jnp.concatenate([h0, h1], axis=1)                                # (B, 2H)
        g1 = jnp.dot(hcat, w1p, preferred_element_type=jnp.float32)             # (B, 4H)
        rz1 = jax.nn.sigmoid(g1[:, 0:2 * H] + b1_rz)
        r1 = rz1[:, 0:H]
        z1 = rz1[:, H:2 * H]
        n1 = jnp.tanh(g1[:, 2 * H:3 * H] + b1_in + r1 * (g1[:, 3 * H:4 * H] + b1_hn))
        h1 = (1.0 - z1) * n1 + z1 * h1

    out_ref[...] = h1.astype(out_ref.dtype)


@jax.jit
def feature_generator_gru(x, params):
    """x: (T, B, I) float32.  Returns (B, H) float32 == output[-1] of a 2-layer GRU."""
    T, B, I = x.shape
    H = params["whh0"].shape[0]

    x_flat = x.reshape(T * B, I)

    # ---- Pack layer-1 weights into one (2H, 4H) matrix (done once, tiny) ----
    wih1 = params["wih1"]                 # (H, 3H)
    whh1 = params["whh1"]                 # (H, 3H)
    zeros_h = jnp.zeros((H, H), jnp.float32)
    w1_top = jnp.concatenate([wih1, zeros_h], axis=1)                                   # (H, 4H)
    w1_bot = jnp.concatenate([whh1[:, :2 * H], zeros_h, whh1[:, 2 * H:]], axis=1)       # (H, 4H)
    w1p = jnp.concatenate([w1_top, w1_bot], axis=0)                                     # (2H, 4H)

    b1_rz = params["bih1"][:, :2 * H] + params["bhh1"][:, :2 * H]                       # (1, 2H)
    b1_in = params["bih1"][:, 2 * H:]                                                   # (1, H)
    b1_hn = params["bhh1"][:, 2 * H:]                                                   # (1, H)

    kernel = functools.partial(_gru_kernel, seq_len=T, batch=B)
    vmem = lambda: pl.BlockSpec(memory_space=pltpu.MemorySpace.VMEM)

    return pl.pallas_call(
        kernel,
        out_shape=jax.ShapeDtypeStruct((B, H), jnp.float32),
        in_specs=[vmem() for _ in range(9)],
        out_specs=vmem(),
    )(
        x_flat,
        params["wih0"], params["whh0"], params["bih0"], params["bhh0"],
        w1p, b1_rz, b1_in, b1_hn,
    )


def init_params(key, input_size, hidden_size):
    """Deterministic init mimicking PyTorch nn.GRU default U(-1/sqrt(H), 1/sqrt(H)).

    Weights are stored transposed vs. PyTorch ((in, 3H) instead of (3H, in)) so the
    kernel can compute x @ W; biases stored as (1, 3H) for broadcasting.
    """
    k = 1.0 / np.sqrt(hidden_size)
    keys = jax.random.split(key, 8)
    u = lambda kk, shape: jax.random.uniform(kk, shape, jnp.float32, -k, k)
    return {
        "wih0": u(keys[0], (input_size, 3 * hidden_size)),
        "whh0": u(keys[1], (hidden_size, 3 * hidden_size)),
        "bih0": u(keys[2], (1, 3 * hidden_size)),
        "bhh0": u(keys[3], (1, 3 * hidden_size)),
        "wih1": u(keys[4], (hidden_size, 3 * hidden_size)),
        "whh1": u(keys[5], (hidden_size, 3 * hidden_size)),
        "bih1": u(keys[6], (1, 3 * hidden_size)),
        "bhh1": u(keys[7], (1, 3 * hidden_size)),
    }


def _reference_gru(x, params):
    """Pure-JAX reference (lax.scan) for correctness checking."""
    H = params["whh0"].shape[0]

    def cell(x_t, h, wih, whh, bih, bhh):
        gi = x_t @ wih + bih
        gh = h @ whh + bhh
        r = jax.nn.sigmoid(gi[:, :H] + gh[:, :H])
        z = jax.nn.sigmoid(gi[:, H:2 * H] + gh[:, H:2 * H])
        n = jnp.tanh(gi[:, 2 * H:] + r * gh[:, 2 * H:])
        return (1.0 - z) * n + z * h

    def step(carry, x_t):
        h0, h1 = carry
        h0 = cell(x_t, h0, params["wih0"], params["whh0"], params["bih0"], params["bhh0"])
        h1 = cell(h0, h1, params["wih1"], params["whh1"], params["bih1"], params["bhh1"])
        return (h0, h1), h1

    B = x.shape[1]
    h0 = jnp.zeros((B, H), jnp.float32)
    h1 = jnp.zeros((B, H), jnp.float32)
    (_, h1_final), _ = jax.lax.scan(step, (h0, h1), x)
    return h1_final


if __name__ == "__main__":
    T, B, I, H = 8, 4, 16, 32   # seq=8, batch=4, input_size=16, gru_hidden_size=32

    key = jax.random.PRNGKey(0)
    kx, kp = jax.random.split(key)
    x = jax.random.normal(kx, (T, B, I), dtype=jnp.float32)
    params = init_params(kp, I, H)

    features = feature_generator_gru(x, params)
    features = jax.block_until_ready(features)

    ref = jax.block_until_ready(_reference_gru(x, params))
    np.testing.assert_allclose(np.asarray(features), np.asarray(ref), atol=1e-5, rtol=1e-5)

    assert features.shape == (B, H)
    print("KERNEL_OK")
</pallas_src>

<mosaic_0001>
module attributes {stable_mosaic.version = 11 : i64} {
  func.func @_gru_kernel(%arg0: memref<32x16xf32, #tpu.memory_space<vmem>>, %arg1: memref<16x96xf32, #tpu.memory_space<vmem>>, %arg2: memref<32x96xf32, #tpu.memory_space<vmem>>, %arg3: memref<1x96xf32, #tpu.memory_space<vmem>>, %arg4: memref<1x96xf32, #tpu.memory_space<vmem>>, %arg5: memref<64x128xf32, #tpu.memory_space<vmem>>, %arg6: memref<1x64xf32, #tpu.memory_space<vmem>>, %arg7: memref<1x32xf32, #tpu.memory_space<vmem>>, %arg8: memref<1x32xf32, #tpu.memory_space<vmem>>, %arg9: memref<4x32xf32, #tpu.memory_space<vmem>>) attributes {dimension_semantics = [], scalar_prefetch = 0 : i64, scratch_operands = 0 : i64, tpu.core_type = #tpu.core_type<tc>} {
    %c0 = arith.constant 0 : index
    %c0_0 = arith.constant 0 : index
    %0 = vector.load %arg0[%c0, %c0_0] : memref<32x16xf32, #tpu.memory_space<vmem>>, vector<32x16xf32>
    %c0_1 = arith.constant 0 : index
    %c0_2 = arith.constant 0 : index
    %1 = vector.load %arg1[%c0_1, %c0_2] : memref<16x96xf32, #tpu.memory_space<vmem>>, vector<16x96xf32>
    %cst = arith.constant dense<0.000000e+00> : vector<32x96xf32>
    %2 = tpu.matmul %0, %1, %cst {dimension_numbers = #tpu.dot_dimension_numbers<[1], [0], [0], [1], [0, 0, 1, 1], [], []>} : vector<32x16xf32>, vector<16x96xf32>, vector<32x96xf32> -> vector<32x96xf32>
    %c0_3 = arith.constant 0 : index
    %c0_4 = arith.constant 0 : index
    %3 = vector.load %arg3[%c0_3, %c0_4] : memref<1x96xf32, #tpu.memory_space<vmem>>, vector<1x96xf32>
    %4 = vector.broadcast %3 : vector<1x96xf32> to vector<32x96xf32>
    %5 = arith.addf %2, %4 : vector<32x96xf32>
    %c0_5 = arith.constant 0 : index
    %c0_6 = arith.constant 0 : index
    %6 = vector.load %arg2[%c0_5, %c0_6] : memref<32x96xf32, #tpu.memory_space<vmem>>, vector<32x96xf32>
    %c0_7 = arith.constant 0 : index
    %c0_8 = arith.constant 0 : index
    %7 = vector.load %arg4[%c0_7, %c0_8] : memref<1x96xf32, #tpu.memory_space<vmem>>, vector<1x96xf32>
    %c0_9 = arith.constant 0 : index
    %c0_10 = arith.constant 0 : index
    %8 = vector.load %arg5[%c0_9, %c0_10] : memref<64x128xf32, #tpu.memory_space<vmem>>, vector<64x128xf32>
    %c0_11 = arith.constant 0 : index
    %c0_12 = arith.constant 0 : index
    %9 = vector.load %arg6[%c0_11, %c0_12] : memref<1x64xf32, #tpu.memory_space<vmem>>, vector<1x64xf32>
    %c0_13 = arith.constant 0 : index
    %c0_14 = arith.constant 0 : index
    %10 = vector.load %arg7[%c0_13, %c0_14] : memref<1x32xf32, #tpu.memory_space<vmem>>, vector<1x32xf32>
    %c0_15 = arith.constant 0 : index
    %c0_16 = arith.constant 0 : index
    %11 = vector.load %arg8[%c0_15, %c0_16] : memref<1x32xf32, #tpu.memory_space<vmem>>, vector<1x32xf32>
    %cst_17 = arith.constant 0.000000e+00 : f32
    %12 = vector.broadcast %cst_17 : f32 to vector<4x32xf32>
    %cst_18 = arith.constant 0.000000e+00 : f32
    %13 = vector.broadcast %cst_18 : f32 to vector<4x32xf32>
    %14 = vector.extract_strided_slice %5 {offsets = [0, 0], sizes = [4, 96], strides = [1, 1]} : vector<32x96xf32> to vector<4x96xf32>
    %cst_19 = arith.constant dense<0.000000e+00> : vector<4x96xf32>
    %15 = tpu.matmul %12, %6, %cst_19 {dimension_numbers = #tpu.dot_dimension_numbers<[1], [0], [0], [1], [0, 0, 1, 1], [], []>} : vector<4x32xf32>, vector<32x96xf32>, vector<4x96xf32> -> vector<4x96xf32>
    %16 = vector.broadcast %7 : vector<1x96xf32> to vector<4x96xf32>
    %17 = arith.addf %15, %16 : vector<4x96xf32>
    %18 = vector.extract_strided_slice %14 {offsets = [0, 0], sizes = [4, 32], strides = [1, 1]} : vector<4x96xf32> to vector<4x32xf32>
    %19 = vector.extract_strided_slice %17 {offsets = [0, 0], sizes = [4, 32], strides = [1, 1]} : vector<4x96xf32> to vector<4x32xf32>
    %20 = arith.addf %18, %19 : vector<4x32xf32>
    %21 = arith.negf %20 : vector<4x32xf32>
    %22 = math.exp %21 : vector<4x32xf32>
    %cst_20 = arith.constant 1.000000e+00 : f32
    %23 = vector.broadcast %cst_20 : f32 to vector<4x32xf32>
    %24 = arith.addf %23, %22 : vector<4x32xf32>
    %25 = arith.divf %23, %24 : vector<4x32xf32>
    %26 = vector.extract_strided_slice %14 {offsets = [0, 32], sizes = [4, 32], strides = [1, 1]} : vector<4x96xf32> to vector<4x32xf32>
    %27 = vector.extract_strided_slice %17 {offsets = [0, 32], sizes = [4, 32], strides = [1, 1]} : vector<4x96xf32> to vector<4x32xf32>
    %28 = arith.addf %26, %27 : vector<4x32xf32>
    %29 = arith.negf %28 : vector<4x32xf32>
    %30 = math.exp %29 : vector<4x32xf32>
    %cst_21 = arith.constant 1.000000e+00 : f32
    %31 = vector.broadcast %cst_21 : f32 to vector<4x32xf32>
    %32 = arith.addf %31, %30 : vector<4x32xf32>
    %33 = arith.divf %31, %32 : vector<4x32xf32>
    %34 = vector.extract_strided_slice %14 {offsets = [0, 64], sizes = [4, 32], strides = [1, 1]} : vector<4x96xf32> to vector<4x32xf32>
    %35 = vector.extract_strided_slice %17 {offsets = [0, 64], sizes = [4, 32], strides = [1, 1]} : vector<4x96xf32> to vector<4x32xf32>
    %36 = arith.mulf %25, %35 : vector<4x32xf32>
    %37 = arith.addf %34, %36 : vector<4x32xf32>
    %38 = math.tanh %37 : vector<4x32xf32>
    %cst_22 = arith.constant 1.000000e+00 : f32
    %39 = vector.broadcast %cst_22 : f32 to vector<4x32xf32>
    %40 = arith.subf %39, %33 : vector<4x32xf32>
    %41 = arith.mulf %40, %38 : vector<4x32xf32>
    %42 = arith.mulf %33, %12 : vector<4x32xf32>
    %43 = arith.addf %41, %42 : vector<4x32xf32>
    %44 = tpu.concatenate %43, %13 in 1 : vector<4x32xf32>, vector<4x32xf32> -> vector<4x64xf32>
    %cst_23 = arith.constant dense<0.000000e+00> : vector<4x128xf32>
    %45 = tpu.matmul %44, %8, %cst_23 {dimension_numbers = #tpu.dot_dimension_numbers<[1], [0], [0], [1], [0, 0, 1, 1], [], []>} : vector<4x64xf32>, vector<64x128xf32>, vector<4x128xf32> -> vector<4x128xf32>
    %46 = vector.extract_strided_slice %45 {offsets = [0, 0], sizes = [4, 64], strides = [1, 1]} : vector<4x128xf32> to vector<4x64xf32>
    %47 = vector.broadcast %9 : vector<1x64xf32> to vector<4x64xf32>
    %48 = arith.addf %46, %47 : vector<4x64xf32>
    %49 = arith.negf %48 : vector<4x64xf32>
    %50 = math.exp %49 : vector<4x64xf32>
    %cst_24 = arith.constant 1.000000e+00 : f32
    %51 = vector.broadcast %cst_24 : f32 to vector<4x64xf32>
    %52 = arith.addf %51, %50 : vector<4x64xf32>
    %53 = arith.divf %51, %52 : vector<4x64xf32>
    %54 = vector.extract_strided_slice %53 {offsets = [0, 0], sizes = [4, 32], strides = [1, 1]} : vector<4x64xf32> to vector<4x32xf32>
    %55 = vector.extract_strided_slice %53 {offsets = [0, 32], sizes = [4, 32], strides = [1, 1]} : vector<4x64xf32> to vector<4x32xf32>
    %56 = vector.extract_strided_slice %45 {offsets = [0, 64], sizes = [4, 32], strides = [1, 1]} : vector<4x128xf32> to vector<4x32xf32>
    %57 = vector.broadcast %10 : vector<1x32xf32> to vector<4x32xf32>
    %58 = arith.addf %56, %57 : vector<4x32xf32>
    %59 = vector.extract_strided_slice %45 {offsets = [0, 96], sizes = [4, 32], strides = [1, 1]} : vector<4x128xf32> to vector<4x32xf32>
    %60 = vector.broadcast %11 : vector<1x32xf32> to vector<4x32xf32>
    %61 = arith.addf %59, %60 : vector<4x32xf32>
    %62 = arith.mulf %54, %61 : vector<4x32xf32>
    %63 = arith.addf %58, %62 : vector<4x32xf32>
    %64 = math.tanh %63 : vector<4x32xf32>
    %cst_25 = arith.constant 1.000000e+00 : f32
    %65 = vector.broadcast %cst_25 : f32 to vector<4x32xf32>
    %66 = arith.subf %65, %55 : vector<4x32xf32>
    %67 = arith.mulf %66, %64 : vector<4x32xf32>
    %68 = arith.mulf %55, %13 : vector<4x32xf32>
    %69 = arith.addf %67, %68 : vector<4x32xf32>
    %70 = vector.extract_strided_slice %5 {offsets = [4, 0], sizes = [4, 96], strides = [1, 1]} : vector<32x96xf32> to vector<4x96xf32>
    %cst_26 = arith.constant dense<0.000000e+00> : vector<4x96xf32>
    %71 = tpu.matmul %43, %6, %cst_26 {dimension_numbers = #tpu.dot_dimension_numbers<[1], [0], [0], [1], [0, 0, 1, 1], [], []>} : vector<4x32xf32>, vector<32x96xf32>, vector<4x96xf32> -> vector<4x96xf32>
    %72 = vector.broadcast %7 : vector<1x96xf32> to vector<4x96xf32>
    %73 = arith.addf %71, %72 : vector<4x96xf32>
    %74 = vector.extract_strided_slice %70 {offsets = [0, 0], sizes = [4, 32], strides = [1, 1]} : vector<4x96xf32> to vector<4x32xf32>
    %75 = vector.extract_strided_slice %73 {offsets = [0, 0], sizes = [4, 32], strides = [1, 1]} : vector<4x96xf32> to vector<4x32xf32>
    %76 = arith.addf %74, %75 : vector<4x32xf32>
    %77 = arith.negf %76 : vector<4x32xf32>
    %78 = math.exp %77 : vector<4x32xf32>
    %cst_27 = arith.constant 1.000000e+00 : f32
    %79 = vector.broadcast %cst_27 : f32 to vector<4x32xf32>
    %80 = arith.addf %79, %78 : vector<4x32xf32>
    %81 = arith.divf %79, %80 : vector<4x32xf32>
    %82 = vector.extract_strided_slice %70 {offsets = [0, 32], sizes = [4, 32], strides = [1, 1]} : vector<4x96xf32> to vector<4x32xf32>
    %83 = vector.extract_strided_slice %73 {offsets = [0, 32], sizes = [4, 32], strides = [1, 1]} : vector<4x96xf32> to vector<4x32xf32>
    %84 = arith.addf %82, %83 : vector<4x32xf32>
    %85 = arith.negf %84 : vector<4x32xf32>
    %86 = math.exp %85 : vector<4x32xf32>
    %cst_28 = arith.constant 1.000000e+00 : f32
    %87 = vector.broadcast %cst_28 : f32 to vector<4x32xf32>
    %88 = arith.addf %87, %86 : vector<4x32xf32>
    %89 = arith.divf %87, %88 : vector<4x32xf32>
    %90 = vector.extract_strided_slice %70 {offsets = [0, 64], sizes = [4, 32], strides = [1, 1]} : vector<4x96xf32> to vector<4x32xf32>
    %91 = vector.extract_strided_slice %73 {offsets = [0, 64], sizes = [4, 32], strides = [1, 1]} : vector<4x96xf32> to vector<4x32xf32>
    %92 = arith.mulf %81, %91 : vector<4x32xf32>
    %93 = arith.addf %90, %92 : vector<4x32xf32>
    %94 = math.tanh %93 : vector<4x32xf32>
    %cst_29 = arith.constant 1.000000e+00 : f32
    %95 = vector.broadcast %cst_29 : f32 to vector<4x32xf32>
    %96 = arith.subf %95, %89 : vector<4x32xf32>
    %97 = arith.mulf %96, %94 : vector<4x32xf32>
    %98 = arith.mulf %89, %43 : vector<4x32xf32>
    %99 = arith.addf %97, %98 : vector<4x32xf32>
    %100 = tpu.concatenate %99, %69 in 1 : vector<4x32xf32>, vector<4x32xf32> -> vector<4x64xf32>
    %cst_30 = arith.constant dense<0.000000e+00> : vector<4x128xf32>
    %101 = tpu.matmul %100, %8, %cst_30 {dimension_numbers = #tpu.dot_dimension_numbers<[1], [0], [0], [1], [0, 0, 1, 1], [], []>} : vector<4x64xf32>, vector<64x128xf32>, vector<4x128xf32> -> vector<4x128xf32>
    %102 = vector.extract_strided_slice %101 {offsets = [0, 0], sizes = [4, 64], strides = [1, 1]} : vector<4x128xf32> to vector<4x64xf32>
    %103 = vector.broadcast %9 : vector<1x64xf32> to vector<4x64xf32>
    %104 = arith.addf %102, %103 : vector<4x64xf32>
    %105 = arith.negf %104 : vector<4x64xf32>
    %106 = math.exp %105 : vector<4x64xf32>
    %cst_31 = arith.constant 1.000000e+00 : f32
    %107 = vector.broadcast %cst_31 : f32 to vector<4x64xf32>
    %108 = arith.addf %107, %106 : vector<4x64xf32>
    %109 = arith.divf %107, %108 : vector<4x64xf32>
    %110 = vector.extract_strided_slice %109 {offsets = [0, 0], sizes = [4, 32], strides = [1, 1]} : vector<4x64xf32> to vector<4x32xf32>
    %111 = vector.extract_strided_slice %109 {offsets = [0, 32], sizes = [4, 32], strides = [1, 1]} : vector<4x64xf32> to vector<4x32xf32>
    %112 = vector.extract_strided_slice %101 {offsets = [0, 64], sizes = [4, 32], strides = [1, 1]} : vector<4x128xf32> to vector<4x32xf32>
    %113 = vector.broadcast %10 : vector<1x32xf32> to vector<4x32xf32>
    %114 = arith.addf %112, %113 : vector<4x32xf32>
    %115 = vector.extract_strided_slice %101 {offsets = [0, 96], sizes = [4, 32], strides = [1, 1]} : vector<4x128xf32> to vector<4x32xf32>
    %116 = vector.broadcast %11 : vector<1x32xf32> to vector<4x32xf32>
    %117 = arith.addf %115, %116 : vector<4x32xf32>
    %118 = arith.mulf %110, %117 : vector<4x32xf32>
    %119 = arith.addf %114, %118 : vector<4x32xf32>
    %120 = math.tanh %119 : vector<4x32xf32>
    %cst_32 = arith.constant 1.000000e+00 : f32
    %121 = vector.broadcast %cst_32 : f32 to vector<4x32xf32>
    %122 = arith.subf %121, %111 : vector<4x32xf32>
    %123 = arith.mulf %122, %120 : vector<4x32xf32>
    %124 = arith.mulf %111, %69 : vector<4x32xf32>
    %125 = arith.addf %123, %124 : vector<4x32xf32>
    %126 = vector.extract_strided_slice %5 {offsets = [8, 0], sizes = [4, 96], strides = [1, 1]} : vector<32x96xf32> to vector<4x96xf32>
    %cst_33 = arith.constant dense<0.000000e+00> : vector<4x96xf32>
    %127 = tpu.matmul %99, %6, %cst_33 {dimension_numbers = #tpu.dot_dimension_numbers<[1], [0], [0], [1], [0, 0, 1, 1], [], []>} : vector<4x32xf32>, vector<32x96xf32>, vector<4x96xf32> -> vector<4x96xf32>
    %128 = vector.broadcast %7 : vector<1x96xf32> to vector<4x96xf32>
    %129 = arith.addf %127, %128 : vector<4x96xf32>
    %130 = vector.extract_strided_slice %126 {offsets = [0, 0], sizes = [4, 32], strides = [1, 1]} : vector<4x96xf32> to vector<4x32xf32>
    %131 = vector.extract_strided_slice %129 {offsets = [0, 0], sizes = [4, 32], strides = [1, 1]} : vector<4x96xf32> to vector<4x32xf32>
    %132 = arith.addf %130, %131 : vector<4x32xf32>
    %133 = arith.negf %132 : vector<4x32xf32>
    %134 = math.exp %133 : vector<4x32xf32>
    %cst_34 = arith.constant 1.000000e+00 : f32
    %135 = vector.broadcast %cst_34 : f32 to vector<4x32xf32>
    %136 = arith.addf %135, %134 : vector<4x32xf32>
    %137 = arith.divf %135, %136 : vector<4x32xf32>
    %138 = vector.extract_strided_slice %126 {offsets = [0, 32], sizes = [4, 32], strides = [1, 1]} : vector<4x96xf32> to vector<4x32xf32>
    %139 = vector.extract_strided_slice %129 {offsets = [0, 32], sizes = [4, 32], strides = [1, 1]} : vector<4x96xf32> to vector<4x32xf32>
    %140 = arith.addf %138, %139 : vector<4x32xf32>
    %141 = arith.negf %140 : vector<4x32xf32>
    %142 = math.exp %141 : vector<4x32xf32>
    %cst_35 = arith.constant 1.000000e+00 : f32
    %143 = vector.broadcast %cst_35 : f32 to vector<4x32xf32>
    %144 = arith.addf %143, %142 : vector<4x32xf32>
    %145 = arith.divf %143, %144 : vector<4x32xf32>
    %146 = vector.extract_strided_slice %126 {offsets = [0, 64], sizes = [4, 32], strides = [1, 1]} : vector<4x96xf32> to vector<4x32xf32>
    %147 = vector.extract_strided_slice %129 {offsets = [0, 64], sizes = [4, 32], strides = [1, 1]} : vector<4x96xf32> to vector<4x32xf32>
    %148 = arith.mulf %137, %147 : vector<4x32xf32>
    %149 = arith.addf %146, %148 : vector<4x32xf32>
    %150 = math.tanh %149 : vector<4x32xf32>
    %cst_36 = arith.constant 1.000000e+00 : f32
    %151 = vector.broadcast %cst_36 : f32 to vector<4x32xf32>
    %152 = arith.subf %151, %145 : vector<4x32xf32>
    %153 = arith.mulf %152, %150 : vector<4x32xf32>
    %154 = arith.mulf %145, %99 : vector<4x32xf32>
    %155 = arith.addf %153, %154 : vector<4x32xf32>
    %156 = tpu.concatenate %155, %125 in 1 : vector<4x32xf32>, vector<4x32xf32> -> vector<4x64xf32>
    %cst_37 = arith.constant dense<0.000000e+00> : vector<4x128xf32>
    %157 = tpu.matmul %156, %8, %cst_37 {dimension_numbers = #tpu.dot_dimension_numbers<[1], [0], [0], [1], [0, 0, 1, 1], [], []>} : vector<4x64xf32>, vector<64x128xf32>, vector<4x128xf32> -> vector<4x128xf32>
    %158 = vector.extract_strided_slice %157 {offsets = [0, 0], sizes = [4, 64], strides = [1, 1]} : vector<4x128xf32> to vector<4x64xf32>
    %159 = vector.broadcast %9 : vector<1x64xf32> to vector<4x64xf32>
    %160 = arith.addf %158, %159 : vector<4x64xf32>
    %161 = arith.negf %160 : vector<4x64xf32>
    %162 = math.exp %161 : vector<4x64xf32>
    %cst_38 = arith.constant 1.000000e+00 : f32
    %163 = vector.broadcast %cst_38 : f32 to vector<4x64xf32>
    %164 = arith.addf %163, %162 : vector<4x64xf32>
    %165 = arith.divf %163, %164 : vector<4x64xf32>
    %166 = vector.extract_strided_slice %165 {offsets = [0, 0], sizes = [4, 32], strides = [1, 1]} : vector<4x64xf32> to vector<4x32xf32>
    %167 = vector.extract_strided_slice %165 {offsets = [0, 32], sizes = [4, 32], strides = [1, 1]} : vector<4x64xf32> to vector<4x32xf32>
    %168 = vector.extract_strided_slice %157 {offsets = [0, 64], sizes = [4, 32], strides = [1, 1]} : vector<4x128xf32> to vector<4x32xf32>
    %169 = vector.broadcast %10 : vector<1x32xf32> to vector<4x32xf32>
    %170 = arith.addf %168, %169 : vector<4x32xf32>
    %171 = vector.extract_strided_slice %157 {offsets = [0, 96], sizes = [4, 32], strides = [1, 1]} : vector<4x128xf32> to vector<4x32xf32>
    %172 = vector.broadcast %11 : vector<1x32xf32> to vector<4x32xf32>
    %173 = arith.addf %171, %172 : vector<4x32xf32>
    %174 = arith.mulf %166, %173 : vector<4x32xf32>
    %175 = arith.addf %170, %174 : vector<4x32xf32>
    %176 = math.tanh %175 : vector<4x32xf32>
    %cst_39 = arith.constant 1.000000e+00 : f32
    %177 = vector.broadcast %cst_39 : f32 to vector<4x32xf32>
    %178 = arith.subf %177, %167 : vector<4x32xf32>
    %179 = arith.mulf %178, %176 : vector<4x32xf32>
    %180 = arith.mulf %167, %125 : vector<4x32xf32>
    %181 = arith.addf %179, %180 : vector<4x32xf32>
    %182 = vector.extract_strided_slice %5 {offsets = [12, 0], sizes = [4, 96], strides = [1, 1]} : vector<32x96xf32> to vector<4x96xf32>
    %cst_40 = arith.constant dense<0.000000e+00> : vector<4x96xf32>
    %183 = tpu.matmul %155, %6, %cst_40 {dimension_numbers = #tpu.dot_dimension_numbers<[1], [0], [0], [1], [0, 0, 1, 1], [], []>} : vector<4x32xf32>, vector<32x96xf32>, vector<4x96xf32> -> vector<4x96xf32>
    %184 = vector.broadcast %7 : vector<1x96xf32> to vector<4x96xf32>
    %185 = arith.addf %183, %184 : vector<4x96xf32>
    %186 = vector.extract_strided_slice %182 {offsets = [0, 0], sizes = [4, 32], strides = [1, 1]} : vector<4x96xf32> to vector<4x32xf32>
    %187 = vector.extract_strided_slice %185 {offsets = [0, 0], sizes = [4, 32], strides = [1, 1]} : vector<4x96xf32> to vector<4x32xf32>
    %188 = arith.addf %186, %187 : vector<4x32xf32>
    %189 = arith.negf %188 : vector<4x32xf32>
    %190 = math.exp %189 : vector<4x32xf32>
    %cst_41 = arith.constant 1.000000e+00 : f32
    %191 = vector.broadcast %cst_41 : f32 to vector<4x32xf32>
    %192 = arith.addf %191, %190 : vector<4x32xf32>
    %193 = arith.divf %191, %192 : vector<4x32xf32>
    %194 = vector.extract_strided_slice %182 {offsets = [0, 32], sizes = [4, 32], strides = [1, 1]} : vector<4x96xf32> to vector<4x32xf32>
    %195 = vector.extract_strided_slice %185 {offsets = [0, 32], sizes = [4, 32], strides = [1, 1]} : vector<4x96xf32> to vector<4x32xf32>
    %196 = arith.addf %194, %195 : vector<4x32xf32>
    %197 = arith.negf %196 : vector<4x32xf32>
    %198 = math.exp %197 : vector<4x32xf32>
    %cst_42 = arith.constant 1.000000e+00 : f32
    %199 = vector.broadcast %cst_42 : f32 to vector<4x32xf32>
    %200 = arith.addf %199, %198 : vector<4x32xf32>
    %201 = arith.divf %199, %200 : vector<4x32xf32>
    %202 = vector.extract_strided_slice %182 {offsets = [0, 64], sizes = [4, 32], strides = [1, 1]} : vector<4x96xf32> to vector<4x32xf32>
    %203 = vector.extract_strided_slice %185 {offsets = [0, 64], sizes = [4, 32], strides = [1, 1]} : vector<4x96xf32> to vector<4x32xf32>
    %204 = arith.mulf %193, %203 : vector<4x32xf32>
    %205 = arith.addf %202, %204 : vector<4x32xf32>
    %206 = math.tanh %205 : vector<4x32xf32>
    %cst_43 = arith.constant 1.000000e+00 : f32
    %207 = vector.broadcast %cst_43 : f32 to vector<4x32xf32>
    %208 = arith.subf %207, %201 : vector<4x32xf32>
    %209 = arith.mulf %208, %206 : vector<4x32xf32>
    %210 = arith.mulf %201, %155 : vector<4x32xf32>
    %211 = arith.addf %209, %210 : vector<4x32xf32>
    %212 = tpu.concatenate %211, %181 in 1 : vector<4x32xf32>, vector<4x32xf32> -> vector<4x64xf32>
    %cst_44 = arith.constant dense<0.000000e+00> : vector<4x128xf32>
    %213 = tpu.matmul %212, %8, %cst_44 {dimension_numbers = #tpu.dot_dimension_numbers<[1], [0], [0], [1], [0, 0, 1, 1], [], []>} : vector<4x64xf32>, vector<64x128xf32>, vector<4x128xf32> -> vector<4x128xf32>
    %214 = vector.extract_strided_slice %213 {offsets = [0, 0], sizes = [4, 64], strides = [1, 1]} : vector<4x128xf32> to vector<4x64xf32>
    %215 = vector.broadcast %9 : vector<1x64xf32> to vector<4x64xf32>
    %216 = arith.addf %214, %215 : vector<4x64xf32>
    %217 = arith.negf %216 : vector<4x64xf32>
    %218 = math.exp %217 : vector<4x64xf32>
    %cst_45 = arith.constant 1.000000e+00 : f32
    %219 = vector.broadcast %cst_45 : f32 to vector<4x64xf32>
    %220 = arith.addf %219, %218 : vector<4x64xf32>
    %221 = arith.divf %219, %220 : vector<4x64xf32>
    %222 = vector.extract_strided_slice %221 {offsets = [0, 0], sizes = [4, 32], strides = [1, 1]} : vector<4x64xf32> to vector<4x32xf32>
    %223 = vector.extract_strided_slice %221 {offsets = [0, 32], sizes = [4, 32], strides = [1, 1]} : vector<4x64xf32> to vector<4x32xf32>
    %224 = vector.extract_strided_slice %213 {offsets = [0, 64], sizes = [4, 32], strides = [1, 1]} : vector<4x128xf32> to vector<4x32xf32>
    %225 = vector.broadcast %10 : vector<1x32xf32> to vector<4x32xf32>
    %226 = arith.addf %224, %225 : vector<4x32xf32>
    %227 = vector.extract_strided_slice %213 {offsets = [0, 96], sizes = [4, 32], strides = [1, 1]} : vector<4x128xf32> to vector<4x32xf32>
    %228 = vector.broadcast %11 : vector<1x32xf32> to vector<4x32xf32>
    %229 = arith.addf %227, %228 : vector<4x32xf32>
    %230 = arith.mulf %222, %229 : vector<4x32xf32>
    %231 = arith.addf %226, %230 : vector<4x32xf32>
    %232 = math.tanh %231 : vector<4x32xf32>
    %cst_46 = arith.constant 1.000000e+00 : f32
    %233 = vector.broadcast %cst_46 : f32 to vector<4x32xf32>
    %234 = arith.subf %233, %223 : vector<4x32xf32>
    %235 = arith.mulf %234, %232 : vector<4x32xf32>
    %236 = arith.mulf %223, %181 : vector<4x32xf32>
    %237 = arith.addf %235, %236 : vector<4x32xf32>
    %238 = vector.extract_strided_slice %5 {offsets = [16, 0], sizes = [4, 96], strides = [1, 1]} : vector<32x96xf32> to vector<4x96xf32>
    %cst_47 = arith.constant dense<0.000000e+00> : vector<4x96xf32>
    %239 = tpu.matmul %211, %6, %cst_47 {dimension_numbers = #tpu.dot_dimension_numbers<[1], [0], [0], [1], [0, 0, 1, 1], [], []>} : vector<4x32xf32>, vector<32x96xf32>, vector<4x96xf32> -> vector<4x96xf32>
    %240 = vector.broadcast %7 : vector<1x96xf32> to vector<4x96xf32>
    %241 = arith.addf %239, %240 : vector<4x96xf32>
    %242 = vector.extract_strided_slice %238 {offsets = [0, 0], sizes = [4, 32], strides = [1, 1]} : vector<4x96xf32> to vector<4x32xf32>
    %243 = vector.extract_strided_slice %241 {offsets = [0, 0], sizes = [4, 32], strides = [1, 1]} : vector<4x96xf32> to vector<4x32xf32>
    %244 = arith.addf %242, %243 : vector<4x32xf32>
    %245 = arith.negf %244 : vector<4x32xf32>
    %246 = math.exp %245 : vector<4x32xf32>
    %cst_48 = arith.constant 1.000000e+00 : f32
    %247 = vector.broadcast %cst_48 : f32 to vector<4x32xf32>
    %248 = arith.addf %247, %246 : vector<4x32xf32>
    %249 = arith.divf %247, %248 : vector<4x32xf32>
    %250 = vector.extract_strided_slice %238 {offsets = [0, 32], sizes = [4, 32], strides = [1, 1]} : vector<4x96xf32> to vector<4x32xf32>
    %251 = vector.extract_strided_slice %241 {offsets = [0, 32], sizes = [4, 32], strides = [1, 1]} : vector<4x96xf32> to vector<4x32xf32>
    %252 = arith.addf %250, %251 : vector<4x32xf32>
    %253 = arith.negf %252 : vector<4x32xf32>
    %254 = math.exp %253 : vector<4x32xf32>
    %cst_49 = arith.constant 1.000000e+00 : f32
    %255 = vector.broadcast %cst_49 : f32 to vector<4x32xf32>
    %256 = arith.addf %255, %254 : vector<4x32xf32>
    %257 = arith.divf %255, %256 : vector<4x32xf32>
    %258 = vector.extract_strided_slice %238 {offsets = [0, 64], sizes = [4, 32], strides = [1, 1]} : vector<4x96xf32> to vector<4x32xf32>
    %259 = vector.extract_strided_slice %241 {offsets = [0, 64], sizes = [4, 32], strides = [1, 1]} : vector<4x96xf32> to vector<4x32xf32>
    %260 = arith.mulf %249, %259 : vector<4x32xf32>
    %261 = arith.addf %258, %260 : vector<4x32xf32>
    %262 = math.tanh %261 : vector<4x32xf32>
    %cst_50 = arith.constant 1.000000e+00 : f32
    %263 = vector.broadcast %cst_50 : f32 to vector<4x32xf32>
    %264 = arith.subf %263, %257 : vector<4x32xf32>
    %265 = arith.mulf %264, %262 : vector<4x32xf32>
    %266 = arith.mulf %257, %211 : vector<4x32xf32>
    %267 = arith.addf %265, %266 : vector<4x32xf32>
    %268 = tpu.concatenate %267, %237 in 1 : vector<4x32xf32>, vector<4x32xf32> -> vector<4x64xf32>
    %cst_51 = arith.constant dense<0.000000e+00> : vector<4x128xf32>
    %269 = tpu.matmul %268, %8, %cst_51 {dimension_numbers = #tpu.dot_dimension_numbers<[1], [0], [0], [1], [0, 0, 1, 1], [], []>} : vector<4x64xf32>, vector<64x128xf32>, vector<4x128xf32> -> vector<4x128xf32>
    %270 = vector.extract_strided_slice %269 {offsets = [0, 0], sizes = [4, 64], strides = [1, 1]} : vector<4x128xf32> to vector<4x64xf32>
    %271 = vector.broadcast %9 : vector<1x64xf32> to vector<4x64xf32>
    %272 = arith.addf %270, %271 : vector<4x64xf32>
    %273 = arith.negf %272 : vector<4x64xf32>
    %274 = math.exp %273 : vector<4x64xf32>
    %cst_52 = arith.constant 1.000000e+00 : f32
    %275 = vector.broadcast %cst_52 : f32 to vector<4x64xf32>
    %276 = arith.addf %275, %274 : vector<4x64xf32>
    %277 = arith.divf %275, %276 : vector<4x64xf32>
    %278 = vector.extract_strided_slice %277 {offsets = [0, 0], sizes = [4, 32], strides = [1, 1]} : vector<4x64xf32> to vector<4x32xf32>
    %279 = vector.extract_strided_slice %277 {offsets = [0, 32], sizes = [4, 32], strides = [1, 1]} : vector<4x64xf32> to vector<4x32xf32>
    %280 = vector.extract_strided_slice %269 {offsets = [0, 64], sizes = [4, 32], strides = [1, 1]} : vector<4x128xf32> to vector<4x32xf32>
    %281 = vector.broadcast %10 : vector<1x32xf32> to vector<4x32xf32>
    %282 = arith.addf %280, %281 : vector<4x32xf32>
    %283 = vector.extract_strided_slice %269 {offsets = [0, 96], sizes = [4, 32], strides = [1, 1]} : vector<4x128xf32> to vector<4x32xf32>
    %284 = vector.broadcast %11 : vector<1x32xf32> to vector<4x32xf32>
    %285 = arith.addf %283, %284 : vector<4x32xf32>
    %286 = arith.mulf %278, %285 : vector<4x32xf32>
    %287 = arith.addf %282, %286 : vector<4x32xf32>
    %288 = math.tanh %287 : vector<4x32xf32>
    %cst_53 = arith.constant 1.000000e+00 : f32
    %289 = vector.broadcast %cst_53 : f32 to vector<4x32xf32>
    %290 = arith.subf %289, %279 : vector<4x32xf32>
    %291 = arith.mulf %290, %288 : vector<4x32xf32>
    %292 = arith.mulf %279, %237 : vector<4x32xf32>
    %293 = arith.addf %291, %292 : vector<4x32xf32>
    %294 = vector.extract_strided_slice %5 {offsets = [20, 0], sizes = [4, 96], strides = [1, 1]} : vector<32x96xf32> to vector<4x96xf32>
    %cst_54 = arith.constant dense<0.000000e+00> : vector<4x96xf32>
    %295 = tpu.matmul %267, %6, %cst_54 {dimension_numbers = #tpu.dot_dimension_numbers<[1], [0], [0], [1], [0, 0, 1, 1], [], []>} : vector<4x32xf32>, vector<32x96xf32>, vector<4x96xf32> -> vector<4x96xf32>
    %296 = vector.broadcast %7 : vector<1x96xf32> to vector<4x96xf32>
    %297 = arith.addf %295, %296 : vector<4x96xf32>
    %298 = vector.extract_strided_slice %294 {offsets = [0, 0], sizes = [4, 32], strides = [1, 1]} : vector<4x96xf32> to vector<4x32xf32>
    %299 = vector.extract_strided_slice %297 {offsets = [0, 0], sizes = [4, 32], strides = [1, 1]} : vector<4x96xf32> to vector<4x32xf32>
    %300 = arith.addf %298, %299 : vector<4x32xf32>
    %301 = arith.negf %300 : vector<4x32xf32>
    %302 = math.exp %301 : vector<4x32xf32>
    %cst_55 = arith.constant 1.000000e+00 : f32
    %303 = vector.broadcast %cst_55 : f32 to vector<4x32xf32>
    %304 = arith.addf %303, %302 : vector<4x32xf32>
    %305 = arith.divf %303, %304 : vector<4x32xf32>
    %306 = vector.extract_strided_slice %294 {offsets = [0, 32], sizes = [4, 32], strides = [1, 1]} : vector<4x96xf32> to vector<4x32xf32>
    %307 = vector.extract_strided_slice %297 {offsets = [0, 32], sizes = [4, 32], strides = [1, 1]} : vector<4x96xf32> to vector<4x32xf32>
    %308 = arith.addf %306, %307 : vector<4x32xf32>
    %309 = arith.negf %308 : vector<4x32xf32>
    %310 = math.exp %309 : vector<4x32xf32>
    %cst_56 = arith.constant 1.000000e+00 : f32
    %311 = vector.broadcast %cst_56 : f32 to vector<4x32xf32>
    %312 = arith.addf %311, %310 : vector<4x32xf32>
    %313 = arith.divf %311, %312 : vector<4x32xf32>
    %314 = vector.extract_strided_slice %294 {offsets = [0, 64], sizes = [4, 32], strides = [1, 1]} : vector<4x96xf32> to vector<4x32xf32>
    %315 = vector.extract_strided_slice %297 {offsets = [0, 64], sizes = [4, 32], strides = [1, 1]} : vector<4x96xf32> to vector<4x32xf32>
    %316 = arith.mulf %305, %315 : vector<4x32xf32>
    %317 = arith.addf %314, %316 : vector<4x32xf32>
    %318 = math.tanh %317 : vector<4x32xf32>
    %cst_57 = arith.constant 1.000000e+00 : f32
    %319 = vector.broadcast %cst_57 : f32 to vector<4x32xf32>
    %320 = arith.subf %319, %313 : vector<4x32xf32>
    %321 = arith.mulf %320, %318 : vector<4x32xf32>
    %322 = arith.mulf %313, %267 : vector<4x32xf32>
    %323 = arith.addf %321, %322 : vector<4x32xf32>
    %324 = tpu.concatenate %323, %293 in 1 : vector<4x32xf32>, vector<4x32xf32> -> vector<4x64xf32>
    %cst_58 = arith.constant dense<0.000000e+00> : vector<4x128xf32>
    %325 = tpu.matmul %324, %8, %cst_58 {dimension_numbers = #tpu.dot_dimension_numbers<[1], [0], [0], [1], [0, 0, 1, 1], [], []>} : vector<4x64xf32>, vector<64x128xf32>, vector<4x128xf32> -> vector<4x128xf32>
    %326 = vector.extract_strided_slice %325 {offsets = [0, 0], sizes = [4, 64], strides = [1, 1]} : vector<4x128xf32> to vector<4x64xf32>
    %327 = vector.broadcast %9 : vector<1x64xf32> to vector<4x64xf32>
    %328 = arith.addf %326, %327 : vector<4x64xf32>
    %329 = arith.negf %328 : vector<4x64xf32>
    %330 = math.exp %329 : vector<4x64xf32>
    %cst_59 = arith.constant 1.000000e+00 : f32
    %331 = vector.broadcast %cst_59 : f32 to vector<4x64xf32>
    %332 = arith.addf %331, %330 : vector<4x64xf32>
    %333 = arith.divf %331, %332 : vector<4x64xf32>
    %334 = vector.extract_strided_slice %333 {offsets = [0, 0], sizes = [4, 32], strides = [1, 1]} : vector<4x64xf32> to vector<4x32xf32>
    %335 = vector.extract_strided_slice %333 {offsets = [0, 32], sizes = [4, 32], strides = [1, 1]} : vector<4x64xf32> to vector<4x32xf32>
    %336 = vector.extract_strided_slice %325 {offsets = [0, 64], sizes = [4, 32], strides = [1, 1]} : vector<4x128xf32> to vector<4x32xf32>
    %337 = vector.broadcast %10 : vector<1x32xf32> to vector<4x32xf32>
    %338 = arith.addf %336, %337 : vector<4x32xf32>
    %339 = vector.extract_strided_slice %325 {offsets = [0, 96], sizes = [4, 32], strides = [1, 1]} : vector<4x128xf32> to vector<4x32xf32>
    %340 = vector.broadcast %11 : vector<1x32xf32> to vector<4x32xf32>
    %341 = arith.addf %339, %340 : vector<4x32xf32>
    %342 = arith.mulf %334, %341 : vector<4x32xf32>
    %343 = arith.addf %338, %342 : vector<4x32xf32>
    %344 = math.tanh %343 : vector<4x32xf32>
    %cst_60 = arith.constant 1.000000e+00 : f32
    %345 = vector.broadcast %cst_60 : f32 to vector<4x32xf32>
    %346 = arith.subf %345, %335 : vector<4x32xf32>
    %347 = arith.mulf %346, %344 : vector<4x32xf32>
    %348 = arith.mulf %335, %293 : vector<4x32xf32>
    %349 = arith.addf %347, %348 : vector<4x32xf32>
    %350 = vector.extract_strided_slice %5 {offsets = [24, 0], sizes = [4, 96], strides = [1, 1]} : vector<32x96xf32> to vector<4x96xf32>
    %cst_61 = arith.constant dense<0.000000e+00> : vector<4x96xf32>
    %351 = tpu.matmul %323, %6, %cst_61 {dimension_numbers = #tpu.dot_dimension_numbers<[1], [0], [0], [1], [0, 0, 1, 1], [], []>} : vector<4x32xf32>, vector<32x96xf32>, vector<4x96xf32> -> vector<4x96xf32>
    %352 = vector.broadcast %7 : vector<1x96xf32> to vector<4x96xf32>
    %353 = arith.addf %351, %352 : vector<4x96xf32>
    %354 = vector.extract_strided_slice %350 {offsets = [0, 0], sizes = [4, 32], strides = [1, 1]} : vector<4x96xf32> to vector<4x32xf32>
    %355 = vector.extract_strided_slice %353 {offsets = [0, 0], sizes = [4, 32], strides = [1, 1]} : vector<4x96xf32> to vector<4x32xf32>
    %356 = arith.addf %354, %355 : vector<4x32xf32>
    %357 = arith.negf %356 : vector<4x32xf32>
    %358 = math.exp %357 : vector<4x32xf32>
    %cst_62 = arith.constant 1.000000e+00 : f32
    %359 = vector.broadcast %cst_62 : f32 to vector<4x32xf32>
    %360 = arith.addf %359, %358 : vector<4x32xf32>
    %361 = arith.divf %359, %360 : vector<4x32xf32>
    %362 = vector.extract_strided_slice %350 {offsets = [0, 32], sizes = [4, 32], strides = [1, 1]} : vector<4x96xf32> to vector<4x32xf32>
    %363 = vector.extract_strided_slice %353 {offsets = [0, 32], sizes = [4, 32], strides = [1, 1]} : vector<4x96xf32> to vector<4x32xf32>
    %364 = arith.addf %362, %363 : vector<4x32xf32>
    %365 = arith.negf %364 : vector<4x32xf32>
    %366 = math.exp %365 : vector<4x32xf32>
    %cst_63 = arith.constant 1.000000e+00 : f32
    %367 = vector.broadcast %cst_63 : f32 to vector<4x32xf32>
    %368 = arith.addf %367, %366 : vector<4x32xf32>
    %369 = arith.divf %367, %368 : vector<4x32xf32>
    %370 = vector.extract_strided_slice %350 {offsets = [0, 64], sizes = [4, 32], strides = [1, 1]} : vector<4x96xf32> to vector<4x32xf32>
    %371 = vector.extract_strided_slice %353 {offsets = [0, 64], sizes = [4, 32], strides = [1, 1]} : vector<4x96xf32> to vector<4x32xf32>
    %372 = arith.mulf %361, %371 : vector<4x32xf32>
    %373 = arith.addf %370, %372 : vector<4x32xf32>
    %374 = math.tanh %373 : vector<4x32xf32>
    %cst_64 = arith.constant 1.000000e+00 : f32
    %375 = vector.broadcast %cst_64 : f32 to vector<4x32xf32>
    %376 = arith.subf %375, %369 : vector<4x32xf32>
    %377 = arith.mulf %376, %374 : vector<4x32xf32>
    %378 = arith.mulf %369, %323 : vector<4x32xf32>
    %379 = arith.addf %377, %378 : vector<4x32xf32>
    %380 = tpu.concatenate %379, %349 in 1 : vector<4x32xf32>, vector<4x32xf32> -> vector<4x64xf32>
    %cst_65 = arith.constant dense<0.000000e+00> : vector<4x128xf32>
    %381 = tpu.matmul %380, %8, %cst_65 {dimension_numbers = #tpu.dot_dimension_numbers<[1], [0], [0], [1], [0, 0, 1, 1], [], []>} : vector<4x64xf32>, vector<64x128xf32>, vector<4x128xf32> -> vector<4x128xf32>
    %382 = vector.extract_strided_slice %381 {offsets = [0, 0], sizes = [4, 64], strides = [1, 1]} : vector<4x128xf32> to vector<4x64xf32>
    %383 = vector.broadcast %9 : vector<1x64xf32> to vector<4x64xf32>
    %384 = arith.addf %382, %383 : vector<4x64xf32>
    %385 = arith.negf %384 : vector<4x64xf32>
    %386 = math.exp %385 : vector<4x64xf32>
    %cst_66 = arith.constant 1.000000e+00 : f32
    %387 = vector.broadcast %cst_66 : f32 to vector<4x64xf32>
    %388 = arith.addf %387, %386 : vector<4x64xf32>
    %389 = arith.divf %387, %388 : vector<4x64xf32>
    %390 = vector.extract_strided_slice %389 {offsets = [0, 0], sizes = [4, 32], strides = [1, 1]} : vector<4x64xf32> to vector<4x32xf32>
    %391 = vector.extract_strided_slice %389 {offsets = [0, 32], sizes = [4, 32], strides = [1, 1]} : vector<4x64xf32> to vector<4x32xf32>
    %392 = vector.extract_strided_slice %381 {offsets = [0, 64], sizes = [4, 32], strides = [1, 1]} : vector<4x128xf32> to vector<4x32xf32>
    %393 = vector.broadcast %10 : vector<1x32xf32> to vector<4x32xf32>
    %394 = arith.addf %392, %393 : vector<4x32xf32>
    %395 = vector.extract_strided_slice %381 {offsets = [0, 96], sizes = [4, 32], strides = [1, 1]} : vector<4x128xf32> to vector<4x32xf32>
    %396 = vector.broadcast %11 : vector<1x32xf32> to vector<4x32xf32>
    %397 = arith.addf %395, %396 : vector<4x32xf32>
    %398 = arith.mulf %390, %397 : vector<4x32xf32>
    %399 = arith.addf %394, %398 : vector<4x32xf32>
    %400 = math.tanh %399 : vector<4x32xf32>
    %cst_67 = arith.constant 1.000000e+00 : f32
    %401 = vector.broadcast %cst_67 : f32 to vector<4x32xf32>
    %402 = arith.subf %401, %391 : vector<4x32xf32>
    %403 = arith.mulf %402, %400 : vector<4x32xf32>
    %404 = arith.mulf %391, %349 : vector<4x32xf32>
    %405 = arith.addf %403, %404 : vector<4x32xf32>
    %406 = vector.extract_strided_slice %5 {offsets = [28, 0], sizes = [4, 96], strides = [1, 1]} : vector<32x96xf32> to vector<4x96xf32>
    %cst_68 = arith.constant dense<0.000000e+00> : vector<4x96xf32>
    %407 = tpu.matmul %379, %6, %cst_68 {dimension_numbers = #tpu.dot_dimension_numbers<[1], [0], [0], [1], [0, 0, 1, 1], [], []>} : vector<4x32xf32>, vector<32x96xf32>, vector<4x96xf32> -> vector<4x96xf32>
    %408 = vector.broadcast %7 : vector<1x96xf32> to vector<4x96xf32>
    %409 = arith.addf %407, %408 : vector<4x96xf32>
    %410 = vector.extract_strided_slice %406 {offsets = [0, 0], sizes = [4, 32], strides = [1, 1]} : vector<4x96xf32> to vector<4x32xf32>
    %411 = vector.extract_strided_slice %409 {offsets = [0, 0], sizes = [4, 32], strides = [1, 1]} : vector<4x96xf32> to vector<4x32xf32>
    %412 = arith.addf %410, %411 : vector<4x32xf32>
    %413 = arith.negf %412 : vector<4x32xf32>
    %414 = math.exp %413 : vector<4x32xf32>
    %cst_69 = arith.constant 1.000000e+00 : f32
    %415 = vector.broadcast %cst_69 : f32 to vector<4x32xf32>
    %416 = arith.addf %415, %414 : vector<4x32xf32>
    %417 = arith.divf %415, %416 : vector<4x32xf32>
    %418 = vector.extract_strided_slice %406 {offsets = [0, 32], sizes = [4, 32], strides = [1, 1]} : vector<4x96xf32> to vector<4x32xf32>
    %419 = vector.extract_strided_slice %409 {offsets = [0, 32], sizes = [4, 32], strides = [1, 1]} : vector<4x96xf32> to vector<4x32xf32>
    %420 = arith.addf %418, %419 : vector<4x32xf32>
    %421 = arith.negf %420 : vector<4x32xf32>
    %422 = math.exp %421 : vector<4x32xf32>
    %cst_70 = arith.constant 1.000000e+00 : f32
    %423 = vector.broadcast %cst_70 : f32 to vector<4x32xf32>
    %424 = arith.addf %423, %422 : vector<4x32xf32>
    %425 = arith.divf %423, %424 : vector<4x32xf32>
    %426 = vector.extract_strided_slice %406 {offsets = [0, 64], sizes = [4, 32], strides = [1, 1]} : vector<4x96xf32> to vector<4x32xf32>
    %427 = vector.extract_strided_slice %409 {offsets = [0, 64], sizes = [4, 32], strides = [1, 1]} : vector<4x96xf32> to vector<4x32xf32>
    %428 = arith.mulf %417, %427 : vector<4x32xf32>
    %429 = arith.addf %426, %428 : vector<4x32xf32>
    %430 = math.tanh %429 : vector<4x32xf32>
    %cst_71 = arith.constant 1.000000e+00 : f32
    %431 = vector.broadcast %cst_71 : f32 to vector<4x32xf32>
    %432 = arith.subf %431, %425 : vector<4x32xf32>
    %433 = arith.mulf %432, %430 : vector<4x32xf32>
    %434 = arith.mulf %425, %379 : vector<4x32xf32>
    %435 = arith.addf %433, %434 : vector<4x32xf32>
    %436 = tpu.concatenate %435, %405 in 1 : vector<4x32xf32>, vector<4x32xf32> -> vector<4x64xf32>
    %cst_72 = arith.constant dense<0.000000e+00> : vector<4x128xf32>
    %437 = tpu.matmul %436, %8, %cst_72 {dimension_numbers = #tpu.dot_dimension_numbers<[1], [0], [0], [1], [0, 0, 1, 1], [], []>} : vector<4x64xf32>, vector<64x128xf32>, vector<4x128xf32> -> vector<4x128xf32>
    %438 = vector.extract_strided_slice %437 {offsets = [0, 0], sizes = [4, 64], strides = [1, 1]} : vector<4x128xf32> to vector<4x64xf32>
    %439 = vector.broadcast %9 : vector<1x64xf32> to vector<4x64xf32>
    %440 = arith.addf %438, %439 : vector<4x64xf32>
    %441 = arith.negf %440 : vector<4x64xf32>
    %442 = math.exp %441 : vector<4x64xf32>
    %cst_73 = arith.constant 1.000000e+00 : f32
    %443 = vector.broadcast %cst_73 : f32 to vector<4x64xf32>
    %444 = arith.addf %443, %442 : vector<4x64xf32>
    %445 = arith.divf %443, %444 : vector<4x64xf32>
    %446 = vector.extract_strided_slice %445 {offsets = [0, 0], sizes = [4, 32], strides = [1, 1]} : vector<4x64xf32> to vector<4x32xf32>
    %447 = vector.extract_strided_slice %445 {offsets = [0, 32], sizes = [4, 32], strides = [1, 1]} : vector<4x64xf32> to vector<4x32xf32>
    %448 = vector.extract_strided_slice %437 {offsets = [0, 64], sizes = [4, 32], strides = [1, 1]} : vector<4x128xf32> to vector<4x32xf32>
    %449 = vector.broadcast %10 : vector<1x32xf32> to vector<4x32xf32>
    %450 = arith.addf %448, %449 : vector<4x32xf32>
    %451 = vector.extract_strided_slice %437 {offsets = [0, 96], sizes = [4, 32], strides = [1, 1]} : vector<4x128xf32> to vector<4x32xf32>
    %452 = vector.broadcast %11 : vector<1x32xf32> to vector<4x32xf32>
    %453 = arith.addf %451, %452 : vector<4x32xf32>
    %454 = arith.mulf %446, %453 : vector<4x32xf32>
    %455 = arith.addf %450, %454 : vector<4x32xf32>
    %456 = math.tanh %455 : vector<4x32xf32>
    %cst_74 = arith.constant 1.000000e+00 : f32
    %457 = vector.broadcast %cst_74 : f32 to vector<4x32xf32>
    %458 = arith.subf %457, %447 : vector<4x32xf32>
    %459 = arith.mulf %458, %456 : vector<4x32xf32>
    %460 = arith.mulf %447, %405 : vector<4x32xf32>
    %461 = arith.addf %459, %460 : vector<4x32xf32>
    %c0_75 = arith.constant 0 : index
    %c0_76 = arith.constant 0 : index
    %462 = vector.load %arg9[%c0_75, %c0_76] : memref<4x32xf32, #tpu.memory_space<vmem>>, vector<4x32xf32>
    tpu.vector_store %arg9[%c0_75, %c0_76], %461 {strides = array<i32>} : memref<4x32xf32, #tpu.memory_space<vmem>>, vector<4x32xf32>,
    return
  }
}

</mosaic_0001>

<llo_original>
// kernel: feature_generator_gru.1
$region0: #{feature_generator_gru.1}
  #allocation0 [shape = 'u32[]', space=smem, size = 0x4, offset = 0x4, fixed_abs, tag = 'smem constant byte address 0x4 - core index']
  #allocation1 [shape = 'u32[144,128]{1,0:T(1,128)}', space=vmem, size = 0x12000, scoped, tag = 'internal scratch']
  %s0 = inlined_call_operand.vmem [shape: f32[32,16], index: 0, kind: input, shape index: {}]
  %s1 = inlined_call_operand.vmem [shape: f32[16,96], index: 1, kind: input, shape index: {}]
  %s2 = inlined_call_operand.vmem [shape: f32[32,96], index: 2, kind: input, shape index: {}]
  %s3 = inlined_call_operand.vmem [shape: f32[1,96], index: 3, kind: input, shape index: {}]
  %s4 = inlined_call_operand.vmem [shape: f32[1,96], index: 4, kind: input, shape index: {}]
  %s5 = inlined_call_operand.vmem [shape: f32[64,128], index: 5, kind: input, shape index: {}]
  %s6 = inlined_call_operand.vmem [shape: f32[1,64], index: 6, kind: input, shape index: {}]
  %s7 = inlined_call_operand.vmem [shape: f32[1,32], index: 7, kind: input, shape index: {}]
  %s8 = inlined_call_operand.vmem [shape: f32[1,32], index: 8, kind: input, shape index: {}]
  %s9 = inlined_call_operand.hbm [shape: f32[4,32], index: 9, kind: output, shape index: {}]
  %s10 = sld [smem:[#allocation0]]
  $region46: #{feature_generator_gru.1} parent=0
    _
  %s12 = ssub.s32 1, %s10
  %s13 = scalar_select 0, %s12, %s10
  $region1: #{feature_generator_gru.1} parent=0
    #allocation2 [shape = 'u8[2048]{0}', space=vmem, size = 0x800, scoped, tag = 'output window, operand 0, single buffered']
    #allocation3 [shape = 's32[1]{0}', space=sflag, size = 0x4, scoped, tag = 'scoped memory for feature_generator_gru.1']
    %14 = vsyncpa [#allocation3], 0
    // Predicated region
    $region2: #{feature_generator_gru.1} parent=1 // pred_check
      _
    $region3: #{feature_generator_gru.1} parent=1 // pred_check_branch
      %16 = sbr.rel (0) target = $region5
    $region4: #{feature_generator_gru.1} parent=1 // pred_region
      _
    $region5: #{feature_generator_gru.1} parent=1 // pred_fallthru
      _
    // Predicated region
    $region6: #{feature_generator_gru.1} parent=1 // pred_check
      _
    $region7: #{feature_generator_gru.1} parent=1 // pred_check_branch
      %18 = sbr.rel (0) target = $region9
    $region8: #{feature_generator_gru.1} parent=1 // pred_region
      _
    $region9: #{feature_generator_gru.1} parent=1 // pred_fallthru
      _
    // Predicated region
    $region10: #{feature_generator_gru.1} parent=1 // pred_check
      _
    $region11: #{feature_generator_gru.1} parent=1 // pred_check_branch
      %20 = sbr.rel (0) target = $region13
    $region12: #{feature_generator_gru.1} parent=1 // pred_region
      _
    $region13: #{feature_generator_gru.1} parent=1 // pred_fallthru
      _
    // Predicated region
    $region14: #{feature_generator_gru.1} parent=1 // pred_check
      _
    $region15: #{feature_generator_gru.1} parent=1 // pred_check_branch
      %22 = sbr.rel (0) target = $region17
    $region16: #{feature_generator_gru.1} parent=1 // pred_region
      _
    $region17: #{feature_generator_gru.1} parent=1 // pred_fallthru
      _
    // Predicated region
    $region18: #{feature_generator_gru.1} parent=1 // pred_check
      _
    $region19: #{feature_generator_gru.1} parent=1 // pred_check_branch
      %24 = sbr.rel (0) target = $region21
    $region20: #{feature_generator_gru.1} parent=1 // pred_region
      _
    $region21: #{feature_generator_gru.1} parent=1 // pred_fallthru
      _
    // Predicated region
    $region22: #{feature_generator_gru.1} parent=1 // pred_check
      _
    $region23: #{feature_generator_gru.1} parent=1 // pred_check_branch
      %26 = sbr.rel (0) target = $region25
    $region24: #{feature_generator_gru.1} parent=1 // pred_region
      _
    $region25: #{feature_generator_gru.1} parent=1 // pred_fallthru
      _
    // Predicated region
    $region26: #{feature_generator_gru.1} parent=1 // pred_check
      _
    $region27: #{feature_generator_gru.1} parent=1 // pred_check_branch
      %28 = sbr.rel (0) target = $region29
    $region28: #{feature_generator_gru.1} parent=1 // pred_region
      _
    $region29: #{feature_generator_gru.1} parent=1 // pred_fallthru
      _
    // Predicated region
    $region30: #{feature_generator_gru.1} parent=1 // pred_check
      _
    $region31: #{feature_generator_gru.1} parent=1 // pred_check_branch
      %30 = sbr.rel (0) target = $region33
    $region32: #{feature_generator_gru.1} parent=1 // pred_region
      _
    $region33: #{feature_generator_gru.1} parent=1 // pred_fallthru
      _
    // Predicated region
    $region34: #{feature_generator_gru.1} parent=1 // pred_check
      _
    $region35: #{feature_generator_gru.1} parent=1 // pred_check_branch
      %32 = sbr.rel (0) target = $region37
    $region36: #{feature_generator_gru.1} parent=1 // pred_region
      _
    $region37: #{feature_generator_gru.1} parent=1 // pred_fallthru
      _
    %v33 = vld [vmem:[%s0] sm:$0xff]
    %v34 = vld [vmem:[%s0 + $0x8] sm:$0xff]
    %v35 = vld [vmem:[%s0 + $0x10] sm:$0xff]
    %v36 = vld [vmem:[%s0 + $0x18] sm:$0xff]
    %v37 = vld [vmem:[%s1] sm:$0xff]
    %v38 = vld [vmem:[%s1 + $0x8] sm:$0xff]
    %v39 = vld [vmem:[%s3] sm:$0x1]
    %v41 = vlaneseq
    %v42 = vshrl.u32 %v41, 7
    %v43 = vsub.s32 0, %v42
    %v44 = vrot.slane %v39, %v43
    %vm46 = vcmask 130048
    %v48 = vsel %vm46, %v33, 0
    %v51 = vsel %vm46, %v34, 0
    %v54 = vsel %vm46, %v35, 0
    %v57 = vsel %vm46, %v36, 0
    %59 = vmatprep.subr.mxu0 0.0
    %60 = vmatpush1.msra.mxu0 %v37
    %61 = vmatprep.subr.mxu0 0.0
    %62 = vmatpush1.msra.mxu0 %v38
    %63 = vmatprep.subr.mxu0 0.0
    %64 = vmatpush1.msra.mxu0 0.0
    %65 = vmatprep.subr.mxu0 0.0
    %66 = vmatpush1.msra.mxu0 0.0
    %67 = vmatprep.subr.mxu0 0.0
    %68 = vmatpush1.msra.mxu0 0.0
    %69 = vmatprep.subr.mxu0 0.0
    %70 = vmatpush1.msra.mxu0 0.0
    %71 = vmatprep.subr.mxu0 0.0
    %72 = vmatpush1.msra.mxu0 0.0
    %73 = vmatprep.subr.mxu0 0.0
    %74 = vmatpush1.msra.mxu0 0.0
    %75 = vmatprep.subr.mxu0 0.0
    %76 = vmatpush1.msra.mxu0 0.0
    %77 = vmatprep.subr.mxu0 0.0
    %78 = vmatpush1.msra.mxu0 0.0
    %79 = vmatprep.subr.mxu0 0.0
    %80 = vmatpush1.msra.mxu0 0.0
    %81 = vmatprep.subr.mxu0 0.0
    %82 = vmatpush1.msra.mxu0 0.0
    %83 = vmatprep.subr.mxu0 0.0
    %84 = vmatpush1.msra.mxu0 0.0
    %85 = vmatprep.subr.mxu0 0.0
    %86 = vmatpush1.msra.mxu0 0.0
    %87 = vmatprep.subr.mxu0 0.0
    %88 = vmatpush1.msra.mxu0 0.0
    %89 = vmatprep.subr.mxu0 0.0
    %90 = vmatpush1.msra.mxu0 0.0
    %91 = vmatprep.subr.mxu0 0.0
    %92 = vmatpush1.msra.mxu0 0.0
    %93 = vmatprep.subr.mxu0 0.0
    %94 = vmatpush1.msra.mxu0 0.0
    %95 = vmatprep.subr.mxu0 0.0
    %96 = vmatpush1.msra.mxu0 0.0
    %97 = vmatprep.subr.mxu0 0.0
    %98 = vmatpush1.msra.mxu0 0.0
    %99 = vmatprep.subr.mxu0 0.0
    %100 = vmatpush1.msra.mxu0 0.0
    %101 = vmatprep.subr.mxu0 0.0
    %102 = vmatpush1.msra.mxu0 0.0
    %103 = vmatprep.subr.mxu0 0.0
    %104 = vmatpush1.msra.mxu0 0.0
    %105 = vmatprep.subr.mxu0 0.0
    %106 = vmatpush1.msra.mxu0 0.0
    %107 = vmatprep.subr.mxu0 0.0
    %108 = vmatpush1.msra.mxu0 0.0
    %109 = vmatprep.subr.mxu0 0.0
    %110 = vmatpush1.msra.mxu0 0.0
    %111 = vmatprep.subr.mxu0 0.0
    %112 = vmatpush1.msra.mxu0 0.0
    %113 = vmatprep.subr.mxu0 0.0
    %114 = vmatpush1.msra.mxu0 0.0
    %115 = vmatprep.subr.mxu0 0.0
    %116 = vmatpush1.msra.mxu0 0.0
    %117 = vmatprep.subr.mxu0 0.0
    %118 = vmatpush1.msra.mxu0 0.0
    %119 = vmatprep.subr.mxu0 0.0
    %120 = vmatpush1.msra.mxu0 0.0
    %121 = vmatprep.subr.mxu0 0.0
    %122 = vmatpush1.msra.mxu0 0.0
    %123 = vmatprep.mubr.f32.mxu0 0.0
    %124 = vmatmul.mubr.f32.gmra.mrb[0].mxu0 %v48
    %v125 = vpop.f32.mrb[0].mxu0
    %v126 = vadd.f32 %v44, %v125
    %v127 = vpop.f32.mrb[0].mxu0
    %128 = vmatprep.mubr.f32.mxu0 0.0
    %129 = vmatmul.mubr.f32.gmra.mrb[0].mxu0 %v51
    %v130 = vpop.f32.mrb[0].mxu0
    %v131 = vadd.f32 %v44, %v130
    %v132 = vpop.f32.mrb[0].mxu0
    %133 = vmatprep.mubr.f32.mxu0 0.0
    %134 = vmatmul.mubr.f32.gmra.mrb[0].mxu0 %v54
    %v135 = vpop.f32.mrb[0].mxu0
    %v136 = vadd.f32 %v44, %v135
    %v137 = vpop.f32.mrb[0].mxu0
    %138 = vmatprep.mubr.f32.mxu0 0.0
    %139 = vmatmul.mubr.f32.gmra.mrb[0].mxu0 %v57
    %v140 = vpop.f32.mrb[0].mxu0
    %v141 = vadd.f32 %v44, %v140
    %v142 = vpop.f32.mrb[0].mxu0
    %143 = vdwg.mxu0
    %v144 = vld [vmem:[%s2] sm:$0xff]
    %v145 = vld [vmem:[%s2 + $0x8] sm:$0xff]
    %v146 = vld [vmem:[%s2 + $0x10] sm:$0xff]
    %v147 = vld [vmem:[%s2 + $0x18] sm:$0xff]
    %v148 = vld [vmem:[%s4] sm:$0x1]
    %v149 = vld [vmem:[%s5] sm:$0xff]
    %v150 = vld [vmem:[%s5 + $0x8] sm:$0xff]
    %v151 = vld [vmem:[%s5 + $0x10] sm:$0xff]
    %v152 = vld [vmem:[%s5 + $0x18] sm:$0xff]
    %v153 = vld [vmem:[%s5 + $0x20] sm:$0xff]
    %v154 = vld [vmem:[%s5 + $0x28] sm:$0xff]
    %v155 = vld [vmem:[%s5 + $0x30] sm:$0xff]
    %v156 = vld [vmem:[%s5 + $0x38] sm:$0xff]
    %v157 = vld [vmem:[%s6] sm:$0x1]
    %v158 = vld [vmem:[%s7] sm:$0x1]
    %v159 = vld [vmem:[%s8] sm:$0x1]
    %v161 = vlaneseq
    %v162 = vshrl.u32 %v161, 7
    %v163 = vsub.s32 0, %v162
    %v164 = vrot.slane %v148, %v163
    %vm166 = vcmask 261120
    %v168 = vsel %vm166, 0.0, 0
    %170 = vmatprep.subr.mxu0 0.0
    %171 = vmatpush1.msra.mxu0 %v144
    %172 = vmatprep.subr.mxu0 0.0
    %173 = vmatpush1.msra.mxu0 %v145
    %174 = vmatprep.subr.mxu0 0.0
    %175 = vmatpush1.msra.mxu0 %v146
    %176 = vmatprep.subr.mxu0 0.0
    %177 = vmatpush1.msra.mxu0 %v147
    %178 = vmatprep.subr.mxu0 0.0
    %179 = vmatpush1.msra.mxu0 0.0
    %180 = vmatprep.subr.mxu0 0.0
    %181 = vmatpush1.msra.mxu0 0.0
    %182 = vmatprep.subr.mxu0 0.0
    %183 = vmatpush1.msra.mxu0 0.0
    %184 = vmatprep.subr.mxu0 0.0
    %185 = vmatpush1.msra.mxu0 0.0
    %186 = vmatprep.subr.mxu0 0.0
    %187 = vmatpush1.msra.mxu0 0.0
    %188 = vmatprep.subr.mxu0 0.0
    %189 = vmatpush1.msra.mxu0 0.0
    %190 = vmatprep.subr.mxu0 0.0
    %191 = vmatpush1.msra.mxu0 0.0
    %192 = vmatprep.subr.mxu0 0.0
    %193 = vmatpush1.msra.mxu0 0.0
    %194 = vmatprep.subr.mxu0 0.0
    %195 = vmatpush1.msra.mxu0 0.0
    %196 = vmatprep.subr.mxu0 0.0
    %197 = vmatpush1.msra.mxu0 0.0
    %198 = vmatprep.subr.mxu0 0.0
    %199 = vmatpush1.msra.mxu0 0.0
    %200 = vmatprep.subr.mxu0 0.0
    %201 = vmatpush1.msra.mxu0 0.0
    %202 = vmatprep.subr.mxu0 0.0
    %203 = vmatpush1.msra.mxu0 0.0
    %204 = vmatprep.subr.mxu0 0.0
    %205 = vmatpush1.msra.mxu0 0.0
    %206 = vmatprep.subr.mxu0 0.0
    %207 = vmatpush1.msra.mxu0 0.0
    %208 = vmatprep.subr.mxu0 0.0
    %209 = vmatpush1.msra.mxu0 0.0
    %210 = vmatprep.subr.mxu0 0.0
    %211 = vmatpush1.msra.mxu0 0.0
    %212 = vmatprep.subr.mxu0 0.0
    %213 = vmatpush1.msra.mxu0 0.0
    %214 = vmatprep.subr.mxu0 0.0
    %215 = vmatpush1.msra.mxu0 0.0
    %216 = vmatprep.subr.mxu0 0.0
    %217 = vmatpush1.msra.mxu0 0.0
    %218 = vmatprep.subr.mxu0 0.0
    %219 = vmatpush1.msra.mxu0 0.0
    %220 = vmatprep.subr.mxu0 0.0
    %221 = vmatpush1.msra.mxu0 0.0
    %222 = vmatprep.subr.mxu0 0.0
    %223 = vmatpush1.msra.mxu0 0.0
    %224 = vmatprep.subr.mxu0 0.0
    %225 = vmatpush1.msra.mxu0 0.0
    %226 = vmatprep.subr.mxu0 0.0
    %227 = vmatpush1.msra.mxu0 0.0
    %228 = vmatprep.subr.mxu0 0.0
    %229 = vmatpush1.msra.mxu0 0.0
    %230 = vmatprep.subr.mxu0 0.0
    %231 = vmatpush1.msra.mxu0 0.0
    %232 = vmatprep.subr.mxu0 0.0
    %233 = vmatpush1.msra.mxu0 0.0
    %234 = vmatprep.mubr.f32.mxu0 0.0
    %235 = vmatmul.mubr.f32.gmra.mrb[0].mxu0 %v168
    %v236 = vpop.f32.mrb[0].mxu0
    %v237 = vadd.f32 %v164, %v236
    %v238 = vpop.f32.mrb[0].mxu0
    %239 = vdwg.mxu0
    %v240 = vadd.f32 %v126, %v237
    %v241 = vxor.u32 %v240, 2147483648
    %v242 = vmul.f32 %v241, 1.442695
    %v243 = vpow.pop %v242
    %v244 = vadd.f32 %v243, 1.0
    %v245 = vrcp.pop %v244
    %v246 = vmul.f32 1.0, %v245
    %248 = vrot.lane.b32.xlu0 %v237, 64
    %v249 = vpop.permute.xlu0 %248
    %v251 = vmul.f32 %v246, %v249
    %253 = vrot.lane.b32.xlu0 %v251, 64
    %v254 = vpop.permute.xlu0 %253
    %v256 = vadd.f32 %v126, %v254
    %v257 = vtanh.pop %v256
    %v258 = vsub.f32 1.0, %v246
    %260 = vrot.lane.b32.xlu0 %v257, 96
    %v261 = vpop.permute.xlu0 %260
    %v263 = vmul.f32 %v258, %v261
    %v264 = vmul.f32 %v246, 0.0
    %v265 = vadd.f32 %v263, %v264
    %267 = vrot.lane.b32.xlu0 %v265, 96
    %v268 = vpop.permute.xlu0 %267
    %v270 = vsel %vm166, %v268, 0.0
    %vm271 = vcmask 523264
    %v273 = vsel %vm271, %v270, 0
    %275 = vmatprep.subr.mxu0 0.0
    %276 = vmatpush1.msra.mxu0 %v149
    %277 = vmatprep.subr.mxu0 0.0
    %278 = vmatpush1.msra.mxu0 %v150
    %279 = vmatprep.subr.mxu0 0.0
    %280 = vmatpush1.msra.mxu0 %v151
    %281 = vmatprep.subr.mxu0 0.0
    %282 = vmatpush1.msra.mxu0 %v152
    %283 = vmatprep.subr.mxu0 0.0
    %284 = vmatpush1.msra.mxu0 %v153
    %285 = vmatprep.subr.mxu0 0.0
    %286 = vmatpush1.msra.mxu0 %v154
    %287 = vmatprep.subr.mxu0 0.0
    %288 = vmatpush1.msra.mxu0 %v155
    %289 = vmatprep.subr.mxu0 0.0
    %290 = vmatpush1.msra.mxu0 %v156
    %291 = vmatprep.subr.mxu0 0.0
    %292 = vmatpush1.msra.mxu0 0.0
    %293 = vmatprep.subr.mxu0 0.0
    %294 = vmatpush1.msra.mxu0 0.0
    %295 = vmatprep.subr.mxu0 0.0
    %296 = vmatpush1.msra.mxu0 0.0
    %297 = vmatprep.subr.mxu0 0.0
    %298 = vmatpush1.msra.mxu0 0.0
    %299 = vmatprep.subr.mxu0 0.0
    %300 = vmatpush1.msra.mxu0 0.0
    %301 = vmatprep.subr.mxu0 0.0
    %302 = vmatpush1.msra.mxu0 0.0
    %303 = vmatprep.subr.mxu0 0.0
    %304 = vmatpush1.msra.mxu0 0.0
    %305 = vmatprep.subr.mxu0 0.0
    %306 = vmatpush1.msra.mxu0 0.0
    %307 = vmatprep.subr.mxu0 0.0
    %308 = vmatpush1.msra.mxu0 0.0
    %309 = vmatprep.subr.mxu0 0.0
    %310 = vmatpush1.msra.mxu0 0.0
    %311 = vmatprep.subr.mxu0 0.0
    %312 = vmatpush1.msra.mxu0 0.0
    %313 = vmatprep.subr.mxu0 0.0
    %314 = vmatpush1.msra.mxu0 0.0
    %315 = vmatprep.subr.mxu0 0.0
    %316 = vmatpush1.msra.mxu0 0.0
    %317 = vmatprep.subr.mxu0 0.0
    %318 = vmatpush1.msra.mxu0 0.0
    %319 = vmatprep.subr.mxu0 0.0
    %320 = vmatpush1.msra.mxu0 0.0
    %321 = vmatprep.subr.mxu0 0.0
    %322 = vmatpush1.msra.mxu0 0.0
    %323 = vmatprep.subr.mxu0 0.0
    %324 = vmatpush1.msra.mxu0 0.0
    %325 = vmatprep.subr.mxu0 0.0
    %326 = vmatpush1.msra.mxu0 0.0
    %327 = vmatprep.subr.mxu0 0.0
    %328 = vmatpush1.msra.mxu0 0.0
    %329 = vmatprep.subr.mxu0 0.0
    %330 = vmatpush1.msra.mxu0 0.0
    %331 = vmatprep.subr.mxu0 0.0
    %332 = vmatpush1.msra.mxu0 0.0
    %333 = vmatprep.subr.mxu0 0.0
    %334 = vmatpush1.msra.mxu0 0.0
    %335 = vmatprep.subr.mxu0 0.0
    %336 = vmatpush1.msra.mxu0 0.0
    %337 = vmatprep.subr.mxu0 0.0
    %338 = vmatpush1.msra.mxu0 0.0
    %339 = vmatprep.mubr.f32.mxu0 0.0
    %340 = vmatmul.mubr.f32.gmra.mrb[0].mxu0 %v273
    %v341 = vpop.f32.mrb[0].mxu0
    %v342 = vadd.f32 0.0, %v341
    %v343 = vpop.f32.mrb[0].mxu0
    %344 = vdwg.mxu0
    %v346 = vlaneseq
    %v347 = vshrl.u32 %v346, 7
    %v348 = vsub.s32 0, %v347
    %v349 = vrot.slane %v157, %v348
    %v351 = vadd.f32 %v342, %v349
    %v352 = vxor.u32 %v351, 2147483648
    %v353 = vmul.f32 %v352, 1.442695
    %v354 = vpow.pop %v353
    %v355 = vadd.f32 %v354, 1.0
    %v356 = vrcp.pop %v355
    %v357 = vmul.f32 1.0, %v356
    %v359 = vlaneseq
    %v360 = vshrl.u32 %v359, 7
    %v361 = vsub.s32 0, %v360
    %v362 = vrot.slane %v158, %v361
    %363 = vrot.lane.b32.xlu0 %v362, 64
    %v364 = vpop.permute.xlu0 %363
    %v366 = vadd.f32 %v342, %v364
    %v368 = vlaneseq
    %v369 = vshrl.u32 %v368, 7
    %v370 = vsub.s32 0, %v369
    %v371 = vrot.slane %v159, %v370
    %372 = vrot.lane.b32.xlu0 %v371, 96
    %v373 = vpop.permute.xlu0 %372
    %v375 = vadd.f32 %v342, %v373
    %377 = vrot.lane.b32.xlu0 %v375, 32
    %v378 = vpop.permute.xlu0 %377
    %v380 = vmul.f32 %v357, %v378
    %382 = vrot.lane.b32.xlu0 %v380, 64
    %v383 = vpop.permute.xlu0 %382
    %v385 = vadd.f32 %v366, %v383
    %v386 = vtanh.pop %v385
    %v387 = vsub.f32 1.0, %v357
    %389 = vrot.lane.b32.xlu0 %v386, 96
    %v390 = vpop.permute.xlu0 %389
    %v392 = vmul.f32 %v387, %v390
    %v393 = vmul.f32 %v357, 0.0
    %v394 = vadd.f32 %v392, %v393
    %v395 = vsel %vm166, %v268, 0
    %397 = vmatprep.subr.mxu0 0.0
    %398 = vmatpush1.msra.mxu0 %v144
    %399 = vmatprep.subr.mxu0 0.0
    %400 = vmatpush1.msra.mxu0 %v145
    %401 = vmatprep.subr.mxu0 0.0
    %402 = vmatpush1.msra.mxu0 %v146
    %403 = vmatprep.subr.mxu0 0.0
    %404 = vmatpush1.msra.mxu0 %v147
    %405 = vmatprep.subr.mxu0 0.0
    %406 = vmatpush1.msra.mxu0 0.0
    %407 = vmatprep.subr.mxu0 0.0
    %408 = vmatpush1.msra.mxu0 0.0
    %409 = vmatprep.subr.mxu0 0.0
    %410 = vmatpush1.msra.mxu0 0.0
    %411 = vmatprep.subr.mxu0 0.0
    %412 = vmatpush1.msra.mxu0 0.0
    %413 = vmatprep.subr.mxu0 0.0
    %414 = vmatpush1.msra.mxu0 0.0
    %415 = vmatprep.subr.mxu0 0.0
    %416 = vmatpush1.msra.mxu0 0.0
    %417 = vmatprep.subr.mxu0 0.0
    %418 = vmatpush1.msra.mxu0 0.0
    %419 = vmatprep.subr.mxu0 0.0
    %420 = vmatpush1.msra.mxu0 0.0
    %421 = vmatprep.subr.mxu0 0.0
    %422 = vmatpush1.msra.mxu0 0.0
    %423 = vmatprep.subr.mxu0 0.0
    %424 = vmatpush1.msra.mxu0 0.0
    %425 = vmatprep.subr.mxu0 0.0
    %426 = vmatpush1.msra.mxu0 0.0
    %427 = vmatprep.subr.mxu0 0.0
    %428 = vmatpush1.msra.mxu0 0.0
    %429 = vmatprep.subr.mxu0 0.0
    %430 = vmatpush1.msra.mxu0 0.0
    %431 = vmatprep.subr.mxu0 0.0
    %432 = vmatpush1.msra.mxu0 0.0
    %433 = vmatprep.subr.mxu0 0.0
    %434 = vmatpush1.msra.mxu0 0.0
    %435 = vmatprep.subr.mxu0 0.0
    %436 = vmatpush1.msra.mxu0 0.0
    %437 = vmatprep.subr.mxu0 0.0
    %438 = vmatpush1.msra.mxu0 0.0
    %439 = vmatprep.subr.mxu0 0.0
    %440 = vmatpush1.msra.mxu0 0.0
    %441 = vmatprep.subr.mxu0 0.0
    %442 = vmatpush1.msra.mxu0 0.0
    %443 = vmatprep.subr.mxu0 0.0
    %444 = vmatpush1.msra.mxu0 0.0
    %445 = vmatprep.subr.mxu0 0.0
    %446 = vmatpush1.msra.mxu0 0.0
    %447 = vmatprep.subr.mxu0 0.0
    %448 = vmatpush1.msra.mxu0 0.0
    %449 = vmatprep.subr.mxu0 0.0
    %450 = vmatpush1.msra.mxu0 0.0
    %451 = vmatprep.subr.mxu0 0.0
    %452 = vmatpush1.msra.mxu0 0.0
    %453 = vmatprep.subr.mxu0 0.0
    %454 = vmatpush1.msra.mxu0 0.0
    %455 = vmatprep.subr.mxu0 0.0
    %456 = vmatpush1.msra.mxu0 0.0
    %457 = vmatprep.subr.mxu0 0.0
    %458 = vmatpush1.msra.mxu0 0.0
    %459 = vmatprep.subr.mxu0 0.0
    %460 = vmatpush1.msra.mxu0 0.0
    %461 = vmatprep.mubr.f32.mxu0 0.0
    %462 = vmatmul.mubr.f32.gmra.mrb[0].mxu0 %v395
    %v463 = vpop.f32.mrb[0].mxu0
    %v464 = vadd.f32 %v164, %v463
    %v465 = vpop.f32.mrb[0].mxu0
    %466 = vdwg.mxu0
    %v468 = vrot.slane %v464, 4
    %v470 = vadd.f32 %v126, %v468
    %v471 = vxor.u32 %v470, 2147483648
    %v472 = vmul.f32 %v471, 1.442695
    %v473 = vpow.pop %v472
    %v474 = vadd.f32 %v473, 1.0
    %v475 = vrcp.pop %v474
    %v476 = vmul.f32 1.0, %v475
    %477 = vrot.lane.b32.xlu0 %v468, 64
    %v478 = vpop.permute.xlu0 %477
    %v480 = vmul.f32 %v476, %v478
    %482 = vrot.lane.b32.xlu0 %v480, 64
    %v483 = vpop.permute.xlu0 %482
    %v485 = vadd.f32 %v126, %v483
    %v486 = vtanh.pop %v485
    %v487 = vsub.f32 1.0, %v476
    %489 = vrot.lane.b32.xlu0 %v486, 96
    %v490 = vpop.permute.xlu0 %489
    %v492 = vmul.f32 %v487, %v490
    %v493 = vrot.slane %v265, 4
    %v495 = vmul.f32 %v476, %v493
    %v496 = vadd.f32 %v492, %v495
    %498 = vrot.lane.b32.xlu0 %v496, 96
    %v499 = vpop.permute.xlu0 %498
    %v502 = vrot.slane %v394, 4
    %v504 = vsel %vm166, %v499, %v502
    %v506 = vrot.slane %v504, 4
    %v507 = vsel %vm271, %v506, 0
    %509 = vmatprep.subr.mxu0 0.0
    %510 = vmatpush1.msra.mxu0 %v149
    %511 = vmatprep.subr.mxu0 0.0
    %512 = vmatpush1.msra.mxu0 %v150
    %513 = vmatprep.subr.mxu0 0.0
    %514 = vmatpush1.msra.mxu0 %v151
    %515 = vmatprep.subr.mxu0 0.0
    %516 = vmatpush1.msra.mxu0 %v152
    %517 = vmatprep.subr.mxu0 0.0
    %518 = vmatpush1.msra.mxu0 %v153
    %519 = vmatprep.subr.mxu0 0.0
    %520 = vmatpush1.msra.mxu0 %v154
    %521 = vmatprep.subr.mxu0 0.0
    %522 = vmatpush1.msra.mxu0 %v155
    %523 = vmatprep.subr.mxu0 0.0
    %524 = vmatpush1.msra.mxu0 %v156
    %525 = vmatprep.subr.mxu0 0.0
    %526 = vmatpush1.msra.mxu0 0.0
    %527 = vmatprep.subr.mxu0 0.0
    %528 = vmatpush1.msra.mxu0 0.0
    %529 = vmatprep.subr.mxu0 0.0
    %530 = vmatpush1.msra.mxu0 0.0
    %531 = vmatprep.subr.mxu0 0.0
    %532 = vmatpush1.msra.mxu0 0.0
    %533 = vmatprep.subr.mxu0 0.0
    %534 = vmatpush1.msra.mxu0 0.0
    %535 = vmatprep.subr.mxu0 0.0
    %536 = vmatpush1.msra.mxu0 0.0
    %537 = vmatprep.subr.mxu0 0.0
    %538 = vmatpush1.msra.mxu0 0.0
    %539 = vmatprep.subr.mxu0 0.0
    %540 = vmatpush1.msra.mxu0 0.0
    %541 = vmatprep.subr.mxu0 0.0
    %542 = vmatpush1.msra.mxu0 0.0
    %543 = vmatprep.subr.mxu0 0.0
    %544 = vmatpush1.msra.mxu0 0.0
    %545 = vmatprep.subr.mxu0 0.0
    %546 = vmatpush1.msra.mxu0 0.0
    %547 = vmatprep.subr.mxu0 0.0
    %548 = vmatpush1.msra.mxu0 0.0
    %549 = vmatprep.subr.mxu0 0.0
    %550 = vmatpush1.msra.mxu0 0.0
    %551 = vmatprep.subr.mxu0 0.0
    %552 = vmatpush1.msra.mxu0 0.0
    %553 = vmatprep.subr.mxu0 0.0
    %554 = vmatpush1.msra.mxu0 0.0
    %555 = vmatprep.subr.mxu0 0.0
    %556 = vmatpush1.msra.mxu0 0.0
    %557 = vmatprep.subr.mxu0 0.0
    %558 = vmatpush1.msra.mxu0 0.0
    %559 = vmatprep.subr.mxu0 0.0
    %560 = vmatpush1.msra.mxu0 0.0
    %561 = vmatprep.subr.mxu0 0.0
    %562 = vmatpush1.msra.mxu0 0.0
    %563 = vmatprep.subr.mxu0 0.0
    %564 = vmatpush1.msra.mxu0 0.0
    %565 = vmatprep.subr.mxu0 0.0
    %566 = vmatpush1.msra.mxu0 0.0
    %567 = vmatprep.subr.mxu0 0.0
    %568 = vmatpush1.msra.mxu0 0.0
    %569 = vmatprep.subr.mxu0 0.0
    %570 = vmatpush1.msra.mxu0 0.0
    %571 = vmatprep.subr.mxu0 0.0
    %572 = vmatpush1.msra.mxu0 0.0
    %573 = vmatprep.mubr.f32.mxu0 0.0
    %574 = vmatmul.mubr.f32.gmra.mrb[0].mxu0 %v507
    %v575 = vpop.f32.mrb[0].mxu0
    %v576 = vadd.f32 0.0, %v575
    %v577 = vpop.f32.mrb[0].mxu0
    %578 = vdwg.mxu0
    %v579 = vadd.f32 %v576, %v349
    %v580 = vxor.u32 %v579, 2147483648
    %v581 = vmul.f32 %v580, 1.442695
    %v582 = vpow.pop %v581
    %v583 = vadd.f32 %v582, 1.0
    %v584 = vrcp.pop %v583
    %v585 = vmul.f32 1.0, %v584
    %v586 = vadd.f32 %v576, %v364
    %v587 = vadd.f32 %v576, %v373
    %589 = vrot.lane.b32.xlu0 %v587, 32
    %v590 = vpop.permute.xlu0 %589
    %v592 = vmul.f32 %v585, %v590
    %594 = vrot.lane.b32.xlu0 %v592, 64
    %v595 = vpop.permute.xlu0 %594
    %v597 = vadd.f32 %v586, %v595
    %v598 = vtanh.pop %v597
    %v599 = vsub.f32 1.0, %v585
    %601 = vrot.lane.b32.xlu0 %v598, 96
    %v602 = vpop.permute.xlu0 %601
    %v604 = vmul.f32 %v599, %v602
    %v605 = vmul.f32 %v585, %v394
    %v606 = vadd.f32 %v604, %v605
    %v607 = vrot.slane %v496, 4
    %608 = vrot.lane.b32.xlu0 %v607, 96
    %v609 = vpop.permute.xlu0 %608
    %v610 = vsel %vm166, %v609, 0
    %612 = vmatprep.subr.mxu0 0.0
    %613 = vmatpush1.msra.mxu0 %v144
    %614 = vmatprep.subr.mxu0 0.0
    %615 = vmatpush1.msra.mxu0 %v145
    %616 = vmatprep.subr.mxu0 0.0
    %617 = vmatpush1.msra.mxu0 %v146
    %618 = vmatprep.subr.mxu0 0.0
    %619 = vmatpush1.msra.mxu0 %v147
    %620 = vmatprep.subr.mxu0 0.0
    %621 = vmatpush1.msra.mxu0 0.0
    %622 = vmatprep.subr.mxu0 0.0
    %623 = vmatpush1.msra.mxu0 0.0
    %624 = vmatprep.subr.mxu0 0.0
    %625 = vmatpush1.msra.mxu0 0.0
    %626 = vmatprep.subr.mxu0 0.0
    %627 = vmatpush1.msra.mxu0 0.0
    %628 = vmatprep.subr.mxu0 0.0
    %629 = vmatpush1.msra.mxu0 0.0
    %630 = vmatprep.subr.mxu0 0.0
    %631 = vmatpush1.msra.mxu0 0.0
    %632 = vmatprep.subr.mxu0 0.0
    %633 = vmatpush1.msra.mxu0 0.0
    %634 = vmatprep.subr.mxu0 0.0
    %635 = vmatpush1.msra.mxu0 0.0
    %636 = vmatprep.subr.mxu0 0.0
    %637 = vmatpush1.msra.mxu0 0.0
    %638 = vmatprep.subr.mxu0 0.0
    %639 = vmatpush1.msra.mxu0 0.0
    %640 = vmatprep.subr.mxu0 0.0
    %641 = vmatpush1.msra.mxu0 0.0
    %642 = vmatprep.subr.mxu0 0.0
    %643 = vmatpush1.msra.mxu0 0.0
    %644 = vmatprep.subr.mxu0 0.0
    %645 = vmatpush1.msra.mxu0 0.0
    %646 = vmatprep.subr.mxu0 0.0
    %647 = vmatpush1.msra.mxu0 0.0
    %648 = vmatprep.subr.mxu0 0.0
    %649 = vmatpush1.msra.mxu0 0.0
    %650 = vmatprep.subr.mxu0 0.0
    %651 = vmatpush1.msra.mxu0 0.0
    %652 = vmatprep.subr.mxu0 0.0
    %653 = vmatpush1.msra.mxu0 0.0
    %654 = vmatprep.subr.mxu0 0.0
    %655 = vmatpush1.msra.mxu0 0.0
    %656 = vmatprep.subr.mxu0 0.0
    %657 = vmatpush1.msra.mxu0 0.0
    %658 = vmatprep.subr.mxu0 0.0
    %659 = vmatpush1.msra.mxu0 0.0
    %660 = vmatprep.subr.mxu0 0.0
    %661 = vmatpush1.msra.mxu0 0.0
    %662 = vmatprep.subr.mxu0 0.0
    %663 = vmatpush1.msra.mxu0 0.0
    %664 = vmatprep.subr.mxu0 0.0
    %665 = vmatpush1.msra.mxu0 0.0
    %666 = vmatprep.subr.mxu0 0.0
    %667 = vmatpush1.msra.mxu0 0.0
    %668 = vmatprep.subr.mxu0 0.0
    %669 = vmatpush1.msra.mxu0 0.0
    %670 = vmatprep.subr.mxu0 0.0
    %671 = vmatpush1.msra.mxu0 0.0
    %672 = vmatprep.subr.mxu0 0.0
    %673 = vmatpush1.msra.mxu0 0.0
    %674 = vmatprep.subr.mxu0 0.0
    %675 = vmatpush1.msra.mxu0 0.0
    %676 = vmatprep.mubr.f32.mxu0 0.0
    %677 = vmatmul.mubr.f32.gmra.mrb[0].mxu0 %v610
    %v678 = vpop.f32.mrb[0].mxu0
    %v679 = vadd.f32 %v164, %v678
    %v680 = vpop.f32.mrb[0].mxu0
    %681 = vdwg.mxu0
    %v682 = vadd.f32 %v131, %v679
    %v683 = vxor.u32 %v682, 2147483648
    %v684 = vmul.f32 %v683, 1.442695
    %v685 = vpow.pop %v684
    %v686 = vadd.f32 %v685, 1.0
    %v687 = vrcp.pop %v686
    %v688 = vmul.f32 1.0, %v687
    %690 = vrot.lane.b32.xlu0 %v679, 64
    %v691 = vpop.permute.xlu0 %690
    %v693 = vmul.f32 %v688, %v691
    %695 = vrot.lane.b32.xlu0 %v693, 64
    %v696 = vpop.permute.xlu0 %695
    %v698 = vadd.f32 %v131, %v696
    %v699 = vtanh.pop %v698
    %v700 = vsub.f32 1.0, %v688
    %702 = vrot.lane.b32.xlu0 %v699, 96
    %v703 = vpop.permute.xlu0 %702
    %v705 = vmul.f32 %v700, %v703
    %v707 = vmul.f32 %v688, %v607
    %v708 = vadd.f32 %v705, %v707
    %710 = vrot.lane.b32.xlu0 %v708, 96
    %v711 = vpop.permute.xlu0 %710
    %v713 = vsel %vm166, %v711, %v606
    %v715 = vsel %vm271, %v713, 0
    %717 = vmatprep.subr.mxu0 0.0
    %718 = vmatpush1.msra.mxu0 %v149
    %719 = vmatprep.subr.mxu0 0.0
    %720 = vmatpush1.msra.mxu0 %v150
    %721 = vmatprep.subr.mxu0 0.0
    %722 = vmatpush1.msra.mxu0 %v151
    %723 = vmatprep.subr.mxu0 0.0
    %724 = vmatpush1.msra.mxu0 %v152
    %725 = vmatprep.subr.mxu0 0.0
    %726 = vmatpush1.msra.mxu0 %v153
    %727 = vmatprep.subr.mxu0 0.0
    %728 = vmatpush1.msra.mxu0 %v154
    %729 = vmatprep.subr.mxu0 0.0
    %730 = vmatpush1.msra.mxu0 %v155
    %731 = vmatprep.subr.mxu0 0.0
    %732 = vmatpush1.msra.mxu0 %v156
    %733 = vmatprep.subr.mxu0 0.0
    %734 = vmatpush1.msra.mxu0 0.0
    %735 = vmatprep.subr.mxu0 0.0
    %736 = vmatpush1.msra.mxu0 0.0
    %737 = vmatprep.subr.mxu0 0.0
    %738 = vmatpush1.msra.mxu0 0.0
    %739 = vmatprep.subr.mxu0 0.0
    %740 = vmatpush1.msra.mxu0 0.0
    %741 = vmatprep.subr.mxu0 0.0
    %742 = vmatpush1.msra.mxu0 0.0
    %743 = vmatprep.subr.mxu0 0.0
    %744 = vmatpush1.msra.mxu0 0.0
    %745 = vmatprep.subr.mxu0 0.0
    %746 = vmatpush1.msra.mxu0 0.0
    %747 = vmatprep.subr.mxu0 0.0
    %748 = vmatpush1.msra.mxu0 0.0
    %749 = vmatprep.subr.mxu0 0.0
    %750 = vmatpush1.msra.mxu0 0.0
    %751 = vmatprep.subr.mxu0 0.0
    %752 = vmatpush1.msra.mxu0 0.0
    %753 = vmatprep.subr.mxu0 0.0
    %754 = vmatpush1.msra.mxu0 0.0
    %755 = vmatprep.subr.mxu0 0.0
    %756 = vmatpush1.msra.mxu0 0.0
    %757 = vmatprep.subr.mxu0 0.0
    %758 = vmatpush1.msra.mxu0 0.0
    %759 = vmatprep.subr.mxu0 0.0
    %760 = vmatpush1.msra.mxu0 0.0
    %761 = vmatprep.subr.mxu0 0.0
    %762 = vmatpush1.msra.mxu0 0.0
    %763 = vmatprep.subr.mxu0 0.0
    %764 = vmatpush1.msra.mxu0 0.0
    %765 = vmatprep.subr.mxu0 0.0
    %766 = vmatpush1.msra.mxu0 0.0
    %767 = vmatprep.subr.mxu0 0.0
    %768 = vmatpush1.msra.mxu0 0.0
    %769 = vmatprep.subr.mxu0 0.0
    %770 = vmatpush1.msra.mxu0 0.0
    %771 = vmatprep.subr.mxu0 0.0
    %772 = vmatpush1.msra.mxu0 0.0
    %773 = vmatprep.subr.mxu0 0.0
    %774 = vmatpush1.msra.mxu0 0.0
    %775 = vmatprep.subr.mxu0 0.0
    %776 = vmatpush1.msra.mxu0 0.0
    %777 = vmatprep.subr.mxu0 0.0
    %778 = vmatpush1.msra.mxu0 0.0
    %779 = vmatprep.subr.mxu0 0.0
    %780 = vmatpush1.msra.mxu0 0.0
    %781 = vmatprep.mubr.f32.mxu0 0.0
    %782 = vmatmul.mubr.f32.gmra.mrb[0].mxu0 %v715
    %v783 = vpop.f32.mrb[0].mxu0
    %v784 = vadd.f32 0.0, %v783
    %v785 = vpop.f32.mrb[0].mxu0
    %786 = vdwg.mxu0
    %v787 = vadd.f32 %v784, %v349
    %v788 = vxor.u32 %v787, 2147483648
    %v789 = vmul.f32 %v788, 1.442695
    %v790 = vpow.pop %v789
    %v791 = vadd.f32 %v790, 1.0
    %v792 = vrcp.pop %v791
    %v793 = vmul.f32 1.0, %v792
    %v794 = vadd.f32 %v784, %v364
    %v795 = vadd.f32 %v784, %v373
    %797 = vrot.lane.b32.xlu0 %v795, 32
    %v798 = vpop.permute.xlu0 %797
    %v800 = vmul.f32 %v793, %v798
    %802 = vrot.lane.b32.xlu0 %v800, 64
    %v803 = vpop.permute.xlu0 %802
    %v805 = vadd.f32 %v794, %v803
    %v806 = vtanh.pop %v805
    %v807 = vsub.f32 1.0, %v793
    %809 = vrot.lane.b32.xlu0 %v806, 96
    %v810 = vpop.permute.xlu0 %809
    %v812 = vmul.f32 %v807, %v810
    %v813 = vmul.f32 %v793, %v606
    %v814 = vadd.f32 %v812, %v813
    %v815 = vsel %vm166, %v711, 0
    %817 = vmatprep.subr.mxu0 0.0
    %818 = vmatpush1.msra.mxu0 %v144
    %819 = vmatprep.subr.mxu0 0.0
    %820 = vmatpush1.msra.mxu0 %v145
    %821 = vmatprep.subr.mxu0 0.0
    %822 = vmatpush1.msra.mxu0 %v146
    %823 = vmatprep.subr.mxu0 0.0
    %824 = vmatpush1.msra.mxu0 %v147
    %825 = vmatprep.subr.mxu0 0.0
    %826 = vmatpush1.msra.mxu0 0.0
    %827 = vmatprep.subr.mxu0 0.0
    %828 = vmatpush1.msra.mxu0 0.0
    %829 = vmatprep.subr.mxu0 0.0
    %830 = vmatpush1.msra.mxu0 0.0
    %831 = vmatprep.subr.mxu0 0.0
    %832 = vmatpush1.msra.mxu0 0.0
    %833 = vmatprep.subr.mxu0 0.0
    %834 = vmatpush1.msra.mxu0 0.0
    %835 = vmatprep.subr.mxu0 0.0
    %836 = vmatpush1.msra.mxu0 0.0
    %837 = vmatprep.subr.mxu0 0.0
    %838 = vmatpush1.msra.mxu0 0.0
    %839 = vmatprep.subr.mxu0 0.0
    %840 = vmatpush1.msra.mxu0 0.0
    %841 = vmatprep.subr.mxu0 0.0
    %842 = vmatpush1.msra.mxu0 0.0
    %843 = vmatprep.subr.mxu0 0.0
    %844 = vmatpush1.msra.mxu0 0.0
    %845 = vmatprep.subr.mxu0 0.0
    %846 = vmatpush1.msra.mxu0 0.0
    %847 = vmatprep.subr.mxu0 0.0
    %848 = vmatpush1.msra.mxu0 0.0
    %849 = vmatprep.subr.mxu0 0.0
    %850 = vmatpush1.msra.mxu0 0.0
    %851 = vmatprep.subr.mxu0 0.0
    %852 = vmatpush1.msra.mxu0 0.0
    %853 = vmatprep.subr.mxu0 0.0
    %854 = vmatpush1.msra.mxu0 0.0
    %855 = vmatprep.subr.mxu0 0.0
    %856 = vmatpush1.msra.mxu0 0.0
    %857 = vmatprep.subr.mxu0 0.0
    %858 = vmatpush1.msra.mxu0 0.0
    %859 = vmatprep.subr.mxu0 0.0
    %860 = vmatpush1.msra.mxu0 0.0
    %861 = vmatprep.subr.mxu0 0.0
    %862 = vmatpush1.msra.mxu0 0.0
    %863 = vmatprep.subr.mxu0 0.0
    %864 = vmatpush1.msra.mxu0 0.0
    %865 = vmatprep.subr.mxu0 0.0
    %866 = vmatpush1.msra.mxu0 0.0
    %867 = vmatprep.subr.mxu0 0.0
    %868 = vmatpush1.msra.mxu0 0.0
    %869 = vmatprep.subr.mxu0 0.0
    %870 = vmatpush1.msra.mxu0 0.0
    %871 = vmatprep.subr.mxu0 0.0
    %872 = vmatpush1.msra.mxu0 0.0
    %873 = vmatprep.subr.mxu0 0.0
    %874 = vmatpush1.msra.mxu0 0.0
    %875 = vmatprep.subr.mxu0 0.0
    %876 = vmatpush1.msra.mxu0 0.0
    %877 = vmatprep.subr.mxu0 0.0
    %878 = vmatpush1.msra.mxu0 0.0
    %879 = vmatprep.subr.mxu0 0.0
    %880 = vmatpush1.msra.mxu0 0.0
    %881 = vmatprep.mubr.f32.mxu0 0.0
    %882 = vmatmul.mubr.f32.gmra.mrb[0].mxu0 %v815
    %v883 = vpop.f32.mrb[0].mxu0
    %v884 = vadd.f32 %v164, %v883
    %v885 = vpop.f32.mrb[0].mxu0
    %886 = vdwg.mxu0
    %v888 = vrot.slane %v884, 4
    %v890 = vadd.f32 %v131, %v888
    %v891 = vxor.u32 %v890, 2147483648
    %v892 = vmul.f32 %v891, 1.442695
    %v893 = vpow.pop %v892
    %v894 = vadd.f32 %v893, 1.0
    %v895 = vrcp.pop %v894
    %v896 = vmul.f32 1.0, %v895
    %897 = vrot.lane.b32.xlu0 %v888, 64
    %v898 = vpop.permute.xlu0 %897
    %v900 = vmul.f32 %v896, %v898
    %902 = vrot.lane.b32.xlu0 %v900, 64
    %v903 = vpop.permute.xlu0 %902
    %v905 = vadd.f32 %v131, %v903
    %v906 = vtanh.pop %v905
    %v907 = vsub.f32 1.0, %v896
    %909 = vrot.lane.b32.xlu0 %v906, 96
    %v910 = vpop.permute.xlu0 %909
    %v912 = vmul.f32 %v907, %v910
    %v913 = vrot.slane %v708, 4
    %v915 = vmul.f32 %v896, %v913
    %v916 = vadd.f32 %v912, %v915
    %918 = vrot.lane.b32.xlu0 %v916, 96
    %v919 = vpop.permute.xlu0 %918
    %v922 = vrot.slane %v814, 4
    %v924 = vsel %vm166, %v919, %v922
    %v926 = vrot.slane %v924, 4
    %v927 = vsel %vm271, %v926, 0
    %929 = vmatprep.subr.mxu0 0.0
    %930 = vmatpush1.msra.mxu0 %v149
    %931 = vmatprep.subr.mxu0 0.0
    %932 = vmatpush1.msra.mxu0 %v150
    %933 = vmatprep.subr.mxu0 0.0
    %934 = vmatpush1.msra.mxu0 %v151
    %935 = vmatprep.subr.mxu0 0.0
    %936 = vmatpush1.msra.mxu0 %v152
    %937 = vmatprep.subr.mxu0 0.0
    %938 = vmatpush1.msra.mxu0 %v153
    %939 = vmatprep.subr.mxu0 0.0
    %940 = vmatpush1.msra.mxu0 %v154
    %941 = vmatprep.subr.mxu0 0.0
    %942 = vmatpush1.msra.mxu0 %v155
    %943 = vmatprep.subr.mxu0 0.0
    %944 = vmatpush1.msra.mxu0 %v156
    %945 = vmatprep.subr.mxu0 0.0
    %946 = vmatpush1.msra.mxu0 0.0
    %947 = vmatprep.subr.mxu0 0.0
    %948 = vmatpush1.msra.mxu0 0.0
    %949 = vmatprep.subr.mxu0 0.0
    %950 = vmatpush1.msra.mxu0 0.0
    %951 = vmatprep.subr.mxu0 0.0
    %952 = vmatpush1.msra.mxu0 0.0
    %953 = vmatprep.subr.mxu0 0.0
    %954 = vmatpush1.msra.mxu0 0.0
    %955 = vmatprep.subr.mxu0 0.0
    %956 = vmatpush1.msra.mxu0 0.0
    %957 = vmatprep.subr.mxu0 0.0
    %958 = vmatpush1.msra.mxu0 0.0
    %959 = vmatprep.subr.mxu0 0.0
    %960 = vmatpush1.msra.mxu0 0.0
    %961 = vmatprep.subr.mxu0 0.0
    %962 = vmatpush1.msra.mxu0 0.0
    %963 = vmatprep.subr.mxu0 0.0
    %964 = vmatpush1.msra.mxu0 0.0
    %965 = vmatprep.subr.mxu0 0.0
    %966 = vmatpush1.msra.mxu0 0.0
    %967 = vmatprep.subr.mxu0 0.0
    %968 = vmatpush1.msra.mxu0 0.0
    %969 = vmatprep.subr.mxu0 0.0
    %970 = vmatpush1.msra.mxu0 0.0
    %971 = vmatprep.subr.mxu0 0.0
    %972 = vmatpush1.msra.mxu0 0.0
    %973 = vmatprep.subr.mxu0 0.0
    %974 = vmatpush1.msra.mxu0 0.0
    %975 = vmatprep.subr.mxu0 0.0
    %976 = vmatpush1.msra.mxu0 0.0
    %977 = vmatprep.subr.mxu0 0.0
    %978 = vmatpush1.msra.mxu0 0.0
    %979 = vmatprep.subr.mxu0 0.0
    %980 = vmatpush1.msra.mxu0 0.0
    %981 = vmatprep.subr.mxu0 0.0
    %982 = vmatpush1.msra.mxu0 0.0
    %983 = vmatprep.subr.mxu0 0.0
    %984 = vmatpush1.msra.mxu0 0.0
    %985 = vmatprep.subr.mxu0 0.0
    %986 = vmatpush1.msra.mxu0 0.0
    %987 = vmatprep.subr.mxu0 0.0
    %988 = vmatpush1.msra.mxu0 0.0
    %989 = vmatprep.subr.mxu0 0.0
    %990 = vmatpush1.msra.mxu0 0.0
    %991 = vmatprep.subr.mxu0 0.0
    %992 = vmatpush1.msra.mxu0 0.0
    %993 = vmatprep.mubr.f32.mxu0 0.0
    %994 = vmatmul.mubr.f32.gmra.mrb[0].mxu0 %v927
    %v995 = vpop.f32.mrb[0].mxu0
    %v996 = vadd.f32 0.0, %v995
    %v997 = vpop.f32.mrb[0].mxu0
    %998 = vdwg.mxu0
    %v999 = vadd.f32 %v996, %v349
    %v1000 = vxor.u32 %v999, 2147483648
    %v1001 = vmul.f32 %v1000, 1.442695
    %v1002 = vpow.pop %v1001
    %v1003 = vadd.f32 %v1002, 1.0
    %v1004 = vrcp.pop %v1003
    %v1005 = vmul.f32 1.0, %v1004
    %v1006 = vadd.f32 %v996, %v364
    %v1007 = vadd.f32 %v996, %v373
    %1009 = vrot.lane.b32.xlu0 %v1007, 32
    %v1010 = vpop.permute.xlu0 %1009
    %v1012 = vmul.f32 %v1005, %v1010
    %1014 = vrot.lane.b32.xlu0 %v1012, 64
    %v1015 = vpop.permute.xlu0 %1014
    %v1017 = vadd.f32 %v1006, %v1015
    %v1018 = vtanh.pop %v1017
    %v1019 = vsub.f32 1.0, %v1005
    %1021 = vrot.lane.b32.xlu0 %v1018, 96
    %v1022 = vpop.permute.xlu0 %1021
    %v1024 = vmul.f32 %v1019, %v1022
    %v1025 = vmul.f32 %v1005, %v814
    %v1026 = vadd.f32 %v1024, %v1025
    %v1027 = vrot.slane %v916, 4
    %1028 = vrot.lane.b32.xlu0 %v1027, 96
    %v1029 = vpop.permute.xlu0 %1028
    %v1030 = vsel %vm166, %v1029, 0
    %1032 = vmatprep.subr.mxu0 0.0
    %1033 = vmatpush1.msra.mxu0 %v144
    %1034 = vmatprep.subr.mxu0 0.0
    %1035 = vmatpush1.msra.mxu0 %v145
    %1036 = vmatprep.subr.mxu0 0.0
    %1037 = vmatpush1.msra.mxu0 %v146
    %1038 = vmatprep.subr.mxu0 0.0
    %1039 = vmatpush1.msra.mxu0 %v147
    %1040 = vmatprep.subr.mxu0 0.0
    %1041 = vmatpush1.msra.mxu0 0.0
    %1042 = vmatprep.subr.mxu0 0.0
    %1043 = vmatpush1.msra.mxu0 0.0
    %1044 = vmatprep.subr.mxu0 0.0
    %1045 = vmatpush1.msra.mxu0 0.0
    %1046 = vmatprep.subr.mxu0 0.0
    %1047 = vmatpush1.msra.mxu0 0.0
    %1048 = vmatprep.subr.mxu0 0.0
    %1049 = vmatpush1.msra.mxu0 0.0
    %1050 = vmatprep.subr.mxu0 0.0
    %1051 = vmatpush1.msra.mxu0 0.0
    %1052 = vmatprep.subr.mxu0 0.0
    %1053 = vmatpush1.msra.mxu0 0.0
    %1054 = vmatprep.subr.mxu0 0.0
    %1055 = vmatpush1.msra.mxu0 0.0
    %1056 = vmatprep.subr.mxu0 0.0
    %1057 = vmatpush1.msra.mxu0 0.0
    %1058 = vmatprep.subr.mxu0 0.0
    %1059 = vmatpush1.msra.mxu0 0.0
    %1060 = vmatprep.subr.mxu0 0.0
    %1061 = vmatpush1.msra.mxu0 0.0
    %1062 = vmatprep.subr.mxu0 0.0
    %1063 = vmatpush1.msra.mxu0 0.0
    %1064 = vmatprep.subr.mxu0 0.0
    %1065 = vmatpush1.msra.mxu0 0.0
    %1066 = vmatprep.subr.mxu0 0.0
    %1067 = vmatpush1.msra.mxu0 0.0
    %1068 = vmatprep.subr.mxu0 0.0
    %1069 = vmatpush1.msra.mxu0 0.0
    %1070 = vmatprep.subr.mxu0 0.0
    %1071 = vmatpush1.msra.mxu0 0.0
    %1072 = vmatprep.subr.mxu0 0.0
    %1073 = vmatpush1.msra.mxu0 0.0
    %1074 = vmatprep.subr.mxu0 0.0
    %1075 = vmatpush1.msra.mxu0 0.0
    %1076 = vmatprep.subr.mxu0 0.0
    %1077 = vmatpush1.msra.mxu0 0.0
    %1078 = vmatprep.subr.mxu0 0.0
    %1079 = vmatpush1.msra.mxu0 0.0
    %1080 = vmatprep.subr.mxu0 0.0
    %1081 = vmatpush1.msra.mxu0 0.0
    %1082 = vmatprep.subr.mxu0 0.0
    %1083 = vmatpush1.msra.mxu0 0.0
    %1084 = vmatprep.subr.mxu0 0.0
    %1085 = vmatpush1.msra.mxu0 0.0
    %1086 = vmatprep.subr.mxu0 0.0
    %1087 = vmatpush1.msra.mxu0 0.0
    %1088 = vmatprep.subr.mxu0 0.0
    %1089 = vmatpush1.msra.mxu0 0.0
    %1090 = vmatprep.subr.mxu0 0.0
    %1091 = vmatpush1.msra.mxu0 0.0
    %1092 = vmatprep.subr.mxu0 0.0
    %1093 = vmatpush1.msra.mxu0 0.0
    %1094 = vmatprep.subr.mxu0 0.0
    %1095 = vmatpush1.msra.mxu0 0.0
    %1096 = vmatprep.mubr.f32.mxu0 0.0
    %1097 = vmatmul.mubr.f32.gmra.mrb[0].mxu0 %v1030
    %v1098 = vpop.f32.mrb[0].mxu0
    %v1099 = vadd.f32 %v164, %v1098
    %v1100 = vpop.f32.mrb[0].mxu0
    %1101 = vdwg.mxu0
    %v1102 = vadd.f32 %v136, %v1099
    %v1103 = vxor.u32 %v1102, 2147483648
    %v1104 = vmul.f32 %v1103, 1.442695
    %v1105 = vpow.pop %v1104
    %v1106 = vadd.f32 %v1105, 1.0
    %v1107 = vrcp.pop %v1106
    %v1108 = vmul.f32 1.0, %v1107
    %1110 = vrot.lane.b32.xlu0 %v1099, 64
    %v1111 = vpop.permute.xlu0 %1110
    %v1113 = vmul.f32 %v1108, %v1111
    %1115 = vrot.lane.b32.xlu0 %v1113, 64
    %v1116 = vpop.permute.xlu0 %1115
    %v1118 = vadd.f32 %v136, %v1116
    %v1119 = vtanh.pop %v1118
    %v1120 = vsub.f32 1.0, %v1108
    %1122 = vrot.lane.b32.xlu0 %v1119, 96
    %v1123 = vpop.permute.xlu0 %1122
    %v1125 = vmul.f32 %v1120, %v1123
    %v1127 = vmul.f32 %v1108, %v1027
    %v1128 = vadd.f32 %v1125, %v1127
    %1130 = vrot.lane.b32.xlu0 %v1128, 96
    %v1131 = vpop.permute.xlu0 %1130
    %v1133 = vsel %vm166, %v1131, %v1026
    %v1135 = vsel %vm271, %v1133, 0
    %1137 = vmatprep.subr.mxu0 0.0
    %1138 = vmatpush1.msra.mxu0 %v149
    %1139 = vmatprep.subr.mxu0 0.0
    %1140 = vmatpush1.msra.mxu0 %v150
    %1141 = vmatprep.subr.mxu0 0.0
    %1142 = vmatpush1.msra.mxu0 %v151
    %1143 = vmatprep.subr.mxu0 0.0
    %1144 = vmatpush1.msra.mxu0 %v152
    %1145 = vmatprep.subr.mxu0 0.0
    %1146 = vmatpush1.msra.mxu0 %v153
    %1147 = vmatprep.subr.mxu0 0.0
    %1148 = vmatpush1.msra.mxu0 %v154
    %1149 = vmatprep.subr.mxu0 0.0
    %1150 = vmatpush1.msra.mxu0 %v155
    %1151 = vmatprep.subr.mxu0 0.0
    %1152 = vmatpush1.msra.mxu0 %v156
    %1153 = vmatprep.subr.mxu0 0.0
    %1154 = vmatpush1.msra.mxu0 0.0
    %1155 = vmatprep.subr.mxu0 0.0
    %1156 = vmatpush1.msra.mxu0 0.0
    %1157 = vmatprep.subr.mxu0 0.0
    %1158 = vmatpush1.msra.mxu0 0.0
    %1159 = vmatprep.subr.mxu0 0.0
    %1160 = vmatpush1.msra.mxu0 0.0
    %1161 = vmatprep.subr.mxu0 0.0
    %1162 = vmatpush1.msra.mxu0 0.0
    %1163 = vmatprep.subr.mxu0 0.0
    %1164 = vmatpush1.msra.mxu0 0.0
    %1165 = vmatprep.subr.mxu0 0.0
    %1166 = vmatpush1.msra.mxu0 0.0
    %1167 = vmatprep.subr.mxu0 0.0
    %1168 = vmatpush1.msra.mxu0 0.0
    %1169 = vmatprep.subr.mxu0 0.0
    %1170 = vmatpush1.msra.mxu0 0.0
    %1171 = vmatprep.subr.mxu0 0.0
    %1172 = vmatpush1.msra.mxu0 0.0
    %1173 = vmatprep.subr.mxu0 0.0
    %1174 = vmatpush1.msra.mxu0 0.0
    %1175 = vmatprep.subr.mxu0 0.0
    %1176 = vmatpush1.msra.mxu0 0.0
    %1177 = vmatprep.subr.mxu0 0.0
    %1178 = vmatpush1.msra.mxu0 0.0
    %1179 = vmatprep.subr.mxu0 0.0
    %1180 = vmatpush1.msra.mxu0 0.0
    %1181 = vmatprep.subr.mxu0 0.0
    %1182 = vmatpush1.msra.mxu0 0.0
    %1183 = vmatprep.subr.mxu0 0.0
    %1184 = vmatpush1.msra.mxu0 0.0
    %1185 = vmatprep.subr.mxu0 0.0
    %1186 = vmatpush1.msra.mxu0 0.0
    %1187 = vmatprep.subr.mxu0 0.0
    %1188 = vmatpush1.msra.mxu0 0.0
    %1189 = vmatprep.subr.mxu0 0.0
    %1190 = vmatpush1.msra.mxu0 0.0
    %1191 = vmatprep.subr.mxu0 0.0
    %1192 = vmatpush1.msra.mxu0 0.0
    %1193 = vmatprep.subr.mxu0 0.0
    %1194 = vmatpush1.msra.mxu0 0.0
    %1195 = vmatprep.subr.mxu0 0.0
    %1196 = vmatpush1.msra.mxu0 0.0
    %1197 = vmatprep.subr.mxu0 0.0
    %1198 = vmatpush1.msra.mxu0 0.0
    %1199 = vmatprep.subr.mxu0 0.0
    %1200 = vmatpush1.msra.mxu0 0.0
    %1201 = vmatprep.mubr.f32.mxu0 0.0
    %1202 = vmatmul.mubr.f32.gmra.mrb[0].mxu0 %v1135
    %v1203 = vpop.f32.mrb[0].mxu0
    %v1204 = vadd.f32 0.0, %v1203
    %v1205 = vpop.f32.mrb[0].mxu0
    %1206 = vdwg.mxu0
    %v1207 = vadd.f32 %v1204, %v349
    %v1208 = vxor.u32 %v1207, 2147483648
    %v1209 = vmul.f32 %v1208, 1.442695
    %v1210 = vpow.pop %v1209
    %v1211 = vadd.f32 %v1210, 1.0
    %v1212 = vrcp.pop %v1211
    %v1213 = vmul.f32 1.0, %v1212
    %v1214 = vadd.f32 %v1204, %v364
    %v1215 = vadd.f32 %v1204, %v373
    %1217 = vrot.lane.b32.xlu0 %v1215, 32
    %v1218 = vpop.permute.xlu0 %1217
    %v1220 = vmul.f32 %v1213, %v1218
    %1222 = vrot.lane.b32.xlu0 %v1220, 64
    %v1223 = vpop.permute.xlu0 %1222
    %v1225 = vadd.f32 %v1214, %v1223
    %v1226 = vtanh.pop %v1225
    %v1227 = vsub.f32 1.0, %v1213
    %1229 = vrot.lane.b32.xlu0 %v1226, 96
    %v1230 = vpop.permute.xlu0 %1229
    %v1232 = vmul.f32 %v1227, %v1230
    %v1233 = vmul.f32 %v1213, %v1026
    %v1234 = vadd.f32 %v1232, %v1233
    %v1235 = vsel %vm166, %v1131, 0
    %1237 = vmatprep.subr.mxu0 0.0
    %1238 = vmatpush1.msra.mxu0 %v144
    %1239 = vmatprep.subr.mxu0 0.0
    %1240 = vmatpush1.msra.mxu0 %v145
    %1241 = vmatprep.subr.mxu0 0.0
    %1242 = vmatpush1.msra.mxu0 %v146
    %1243 = vmatprep.subr.mxu0 0.0
    %1244 = vmatpush1.msra.mxu0 %v147
    %1245 = vmatprep.subr.mxu0 0.0
    %1246 = vmatpush1.msra.mxu0 0.0
    %1247 = vmatprep.subr.mxu0 0.0
    %1248 = vmatpush1.msra.mxu0 0.0
    %1249 = vmatprep.subr.mxu0 0.0
    %1250 = vmatpush1.msra.mxu0 0.0
    %1251 = vmatprep.subr.mxu0 0.0
    %1252 = vmatpush1.msra.mxu0 0.0
    %1253 = vmatprep.subr.mxu0 0.0
    %1254 = vmatpush1.msra.mxu0 0.0
    %1255 = vmatprep.subr.mxu0 0.0
    %1256 = vmatpush1.msra.mxu0 0.0
    %1257 = vmatprep.subr.mxu0 0.0
    %1258 = vmatpush1.msra.mxu0 0.0
    %1259 = vmatprep.subr.mxu0 0.0
    %1260 = vmatpush1.msra.mxu0 0.0
    %1261 = vmatprep.subr.mxu0 0.0
    %1262 = vmatpush1.msra.mxu0 0.0
    %1263 = vmatprep.subr.mxu0 0.0
    %1264 = vmatpush1.msra.mxu0 0.0
    %1265 = vmatprep.subr.mxu0 0.0
    %1266 = vmatpush1.msra.mxu0 0.0
    %1267 = vmatprep.subr.mxu0 0.0
    %1268 = vmatpush1.msra.mxu0 0.0
    %1269 = vmatprep.subr.mxu0 0.0
    %1270 = vmatpush1.msra.mxu0 0.0
    %1271 = vmatprep.subr.mxu0 0.0
    %1272 = vmatpush1.msra.mxu0 0.0
    %1273 = vmatprep.subr.mxu0 0.0
    %1274 = vmatpush1.msra.mxu0 0.0
    %1275 = vmatprep.subr.mxu0 0.0
    %1276 = vmatpush1.msra.mxu0 0.0
    %1277 = vmatprep.subr.mxu0 0.0
    %1278 = vmatpush1.msra.mxu0 0.0
    %1279 = vmatprep.subr.mxu0 0.0
    %1280 = vmatpush1.msra.mxu0 0.0
    %1281 = vmatprep.subr.mxu0 0.0
    %1282 = vmatpush1.msra.mxu0 0.0
    %1283 = vmatprep.subr.mxu0 0.0
    %1284 = vmatpush1.msra.mxu0 0.0
    %1285 = vmatprep.subr.mxu0 0.0
    %1286 = vmatpush1.msra.mxu0 0.0
    %1287 = vmatprep.subr.mxu0 0.0
    %1288 = vmatpush1.msra.mxu0 0.0
    %1289 = vmatprep.subr.mxu0 0.0
    %1290 = vmatpush1.msra.mxu0 0.0
    %1291 = vmatprep.subr.mxu0 0.0
    %1292 = vmatpush1.msra.mxu0 0.0
    %1293 = vmatprep.subr.mxu0 0.0
    %1294 = vmatpush1.msra.mxu0 0.0
    %1295 = vmatprep.subr.mxu0 0.0
    %1296 = vmatpush1.msra.mxu0 0.0
    %1297 = vmatprep.subr.mxu0 0.0
    %1298 = vmatpush1.msra.mxu0 0.0
    %1299 = vmatprep.subr.mxu0 0.0
    %1300 = vmatpush1.msra.mxu0 0.0
    %1301 = vmatprep.mubr.f32.mxu0 0.0
    %1302 = vmatmul.mubr.f32.gmra.mrb[0].mxu0 %v1235
    %v1303 = vpop.f32.mrb[0].mxu0
    %v1304 = vadd.f32 %v164, %v1303
    %v1305 = vpop.f32.mrb[0].mxu0
    %1306 = vdwg.mxu0
    %v1308 = vrot.slane %v1304, 4
    %v1310 = vadd.f32 %v136, %v1308
    %v1311 = vxor.u32 %v1310, 2147483648
    %v1312 = vmul.f32 %v1311, 1.442695
    %v1313 = vpow.pop %v1312
    %v1314 = vadd.f32 %v1313, 1.0
    %v1315 = vrcp.pop %v1314
    %v1316 = vmul.f32 1.0, %v1315
    %1317 = vrot.lane.b32.xlu0 %v1308, 64
    %v1318 = vpop.permute.xlu0 %1317
    %v1320 = vmul.f32 %v1316, %v1318
    %1322 = vrot.lane.b32.xlu0 %v1320, 64
    %v1323 = vpop.permute.xlu0 %1322
    %v1325 = vadd.f32 %v136, %v1323
    %v1326 = vtanh.pop %v1325
    %v1327 = vsub.f32 1.0, %v1316
    %1329 = vrot.lane.b32.xlu0 %v1326, 96
    %v1330 = vpop.permute.xlu0 %1329
    %v1332 = vmul.f32 %v1327, %v1330
    %v1333 = vrot.slane %v1128, 4
    %v1335 = vmul.f32 %v1316, %v1333
    %v1336 = vadd.f32 %v1332, %v1335
    %1338 = vrot.lane.b32.xlu0 %v1336, 96
    %v1339 = vpop.permute.xlu0 %1338
    %v1342 = vrot.slane %v1234, 4
    %v1344 = vsel %vm166, %v1339, %v1342
    %v1346 = vrot.slane %v1344, 4
    %v1347 = vsel %vm271, %v1346, 0
    %1349 = vmatprep.subr.mxu0 0.0
    %1350 = vmatpush1.msra.mxu0 %v149
    %1351 = vmatprep.subr.mxu0 0.0
    %1352 = vmatpush1.msra.mxu0 %v150
    %1353 = vmatprep.subr.mxu0 0.0
    %1354 = vmatpush1.msra.mxu0 %v151
    %1355 = vmatprep.subr.mxu0 0.0
    %1356 = vmatpush1.msra.mxu0 %v152
    %1357 = vmatprep.subr.mxu0 0.0
    %1358 = vmatpush1.msra.mxu0 %v153
    %1359 = vmatprep.subr.mxu0 0.0
    %1360 = vmatpush1.msra.mxu0 %v154
    %1361 = vmatprep.subr.mxu0 0.0
    %1362 = vmatpush1.msra.mxu0 %v155
    %1363 = vmatprep.subr.mxu0 0.0
    %1364 = vmatpush1.msra.mxu0 %v156
    %1365 = vmatprep.subr.mxu0 0.0
    %1366 = vmatpush1.msra.mxu0 0.0
    %1367 = vmatprep.subr.mxu0 0.0
    %1368 = vmatpush1.msra.mxu0 0.0
    %1369 = vmatprep.subr.mxu0 0.0
    %1370 = vmatpush1.msra.mxu0 0.0
    %1371 = vmatprep.subr.mxu0 0.0
    %1372 = vmatpush1.msra.mxu0 0.0
    %1373 = vmatprep.subr.mxu0 0.0
    %1374 = vmatpush1.msra.mxu0 0.0
    %1375 = vmatprep.subr.mxu0 0.0
    %1376 = vmatpush1.msra.mxu0 0.0
    %1377 = vmatprep.subr.mxu0 0.0
    %1378 = vmatpush1.msra.mxu0 0.0
    %1379 = vmatprep.subr.mxu0 0.0
    %1380 = vmatpush1.msra.mxu0 0.0
    %1381 = vmatprep.subr.mxu0 0.0
    %1382 = vmatpush1.msra.mxu0 0.0
    %1383 = vmatprep.subr.mxu0 0.0
    %1384 = vmatpush1.msra.mxu0 0.0
    %1385 = vmatprep.subr.mxu0 0.0
    %1386 = vmatpush1.msra.mxu0 0.0
    %1387 = vmatprep.subr.mxu0 0.0
    %1388 = vmatpush1.msra.mxu0 0.0
    %1389 = vmatprep.subr.mxu0 0.0
    %1390 = vmatpush1.msra.mxu0 0.0
    %1391 = vmatprep.subr.mxu0 0.0
    %1392 = vmatpush1.msra.mxu0 0.0
    %1393 = vmatprep.subr.mxu0 0.0
    %1394 = vmatpush1.msra.mxu0 0.0
    %1395 = vmatprep.subr.mxu0 0.0
    %1396 = vmatpush1.msra.mxu0 0.0
    %1397 = vmatprep.subr.mxu0 0.0
    %1398 = vmatpush1.msra.mxu0 0.0
    %1399 = vmatprep.subr.mxu0 0.0
    %1400 = vmatpush1.msra.mxu0 0.0
    %1401 = vmatprep.subr.mxu0 0.0
    %1402 = vmatpush1.msra.mxu0 0.0
    %1403 = vmatprep.subr.mxu0 0.0
    %1404 = vmatpush1.msra.mxu0 0.0
    %1405 = vmatprep.subr.mxu0 0.0
    %1406 = vmatpush1.msra.mxu0 0.0
    %1407 = vmatprep.subr.mxu0 0.0
    %1408 = vmatpush1.msra.mxu0 0.0
    %1409 = vmatprep.subr.mxu0 0.0
    %1410 = vmatpush1.msra.mxu0 0.0
    %1411 = vmatprep.subr.mxu0 0.0
    %1412 = vmatpush1.msra.mxu0 0.0
    %1413 = vmatprep.mubr.f32.mxu0 0.0
    %1414 = vmatmul.mubr.f32.gmra.mrb[0].mxu0 %v1347
    %v1415 = vpop.f32.mrb[0].mxu0
    %v1416 = vadd.f32 0.0, %v1415
    %v1417 = vpop.f32.mrb[0].mxu0
    %1418 = vdwg.mxu0
    %v1419 = vadd.f32 %v1416, %v349
    %v1420 = vxor.u32 %v1419, 2147483648
    %v1421 = vmul.f32 %v1420, 1.442695
    %v1422 = vpow.pop %v1421
    %v1423 = vadd.f32 %v1422, 1.0
    %v1424 = vrcp.pop %v1423
    %v1425 = vmul.f32 1.0, %v1424
    %v1426 = vadd.f32 %v1416, %v364
    %v1427 = vadd.f32 %v1416, %v373
    %1429 = vrot.lane.b32.xlu0 %v1427, 32
    %v1430 = vpop.permute.xlu0 %1429
    %v1432 = vmul.f32 %v1425, %v1430
    %1434 = vrot.lane.b32.xlu0 %v1432, 64
    %v1435 = vpop.permute.xlu0 %1434
    %v1437 = vadd.f32 %v1426, %v1435
    %v1438 = vtanh.pop %v1437
    %v1439 = vsub.f32 1.0, %v1425
    %1441 = vrot.lane.b32.xlu0 %v1438, 96
    %v1442 = vpop.permute.xlu0 %1441
    %v1444 = vmul.f32 %v1439, %v1442
    %v1445 = vmul.f32 %v1425, %v1234
    %v1446 = vadd.f32 %v1444, %v1445
    %v1447 = vrot.slane %v1336, 4
    %1448 = vrot.lane.b32.xlu0 %v1447, 96
    %v1449 = vpop.permute.xlu0 %1448
    %v1450 = vsel %vm166, %v1449, 0
    %1452 = vmatprep.subr.mxu0 0.0
    %1453 = vmatpush1.msra.mxu0 %v144
    %1454 = vmatprep.subr.mxu0 0.0
    %1455 = vmatpush1.msra.mxu0 %v145
    %1456 = vmatprep.subr.mxu0 0.0
    %1457 = vmatpush1.msra.mxu0 %v146
    %1458 = vmatprep.subr.mxu0 0.0
    %1459 = vmatpush1.msra.mxu0 %v147
    %1460 = vmatprep.subr.mxu0 0.0
    %1461 = vmatpush1.msra.mxu0 0.0
    %1462 = vmatprep.subr.mxu0 0.0
    %1463 = vmatpush1.msra.mxu0 0.0
    %1464 = vmatprep.subr.mxu0 0.0
    %1465 = vmatpush1.msra.mxu0 0.0
    %1466 = vmatprep.subr.mxu0 0.0
    %1467 = vmatpush1.msra.mxu0 0.0
    %1468 = vmatprep.subr.mxu0 0.0
    %1469 = vmatpush1.msra.mxu0 0.0
    %1470 = vmatprep.subr.mxu0 0.0
    %1471 = vmatpush1.msra.mxu0 0.0
    %1472 = vmatprep.subr.mxu0 0.0
    %1473 = vmatpush1.msra.mxu0 0.0
    %1474 = vmatprep.subr.mxu0 0.0
    %1475 = vmatpush1.msra.mxu0 0.0
    %1476 = vmatprep.subr.mxu0 0.0
    %1477 = vmatpush1.msra.mxu0 0.0
    %1478 = vmatprep.subr.mxu0 0.0
    %1479 = vmatpush1.msra.mxu0 0.0
    %1480 = vmatprep.subr.mxu0 0.0
    %1481 = vmatpush1.msra.mxu0 0.0
    %1482 = vmatprep.subr.mxu0 0.0
    %1483 = vmatpush1.msra.mxu0 0.0
    %1484 = vmatprep.subr.mxu0 0.0
    %1485 = vmatpush1.msra.mxu0 0.0
    %1486 = vmatprep.subr.mxu0 0.0
    %1487 = vmatpush1.msra.mxu0 0.0
    %1488 = vmatprep.subr.mxu0 0.0
    %1489 = vmatpush1.msra.mxu0 0.0
    %1490 = vmatprep.subr.mxu0 0.0
    %1491 = vmatpush1.msra.mxu0 0.0
    %1492 = vmatprep.subr.mxu0 0.0
    %1493 = vmatpush1.msra.mxu0 0.0
    %1494 = vmatprep.subr.mxu0 0.0
    %1495 = vmatpush1.msra.mxu0 0.0
    %1496 = vmatprep.subr.mxu0 0.0
    %1497 = vmatpush1.msra.mxu0 0.0
    %1498 = vmatprep.subr.mxu0 0.0
    %1499 = vmatpush1.msra.mxu0 0.0
    %1500 = vmatprep.subr.mxu0 0.0
    %1501 = vmatpush1.msra.mxu0 0.0
    %1502 = vmatprep.subr.mxu0 0.0
    %1503 = vmatpush1.msra.mxu0 0.0
    %1504 = vmatprep.subr.mxu0 0.0
    %1505 = vmatpush1.msra.mxu0 0.0
    %1506 = vmatprep.subr.mxu0 0.0
    %1507 = vmatpush1.msra.mxu0 0.0
    %1508 = vmatprep.subr.mxu0 0.0
    %1509 = vmatpush1.msra.mxu0 0.0
    %1510 = vmatprep.subr.mxu0 0.0
    %1511 = vmatpush1.msra.mxu0 0.0
    %1512 = vmatprep.subr.mxu0 0.0
    %1513 = vmatpush1.msra.mxu0 0.0
    %1514 = vmatprep.subr.mxu0 0.0
    %1515 = vmatpush1.msra.mxu0 0.0
    %1516 = vmatprep.mubr.f32.mxu0 0.0
    %1517 = vmatmul.mubr.f32.gmra.mrb[0].mxu0 %v1450
    %v1518 = vpop.f32.mrb[0].mxu0
    %v1519 = vadd.f32 %v164, %v1518
    %v1520 = vpop.f32.mrb[0].mxu0
    %1521 = vdwg.mxu0
    %v1522 = vadd.f32 %v141, %v1519
    %v1523 = vxor.u32 %v1522, 2147483648
    %v1524 = vmul.f32 %v1523, 1.442695
    %v1525 = vpow.pop %v1524
    %v1526 = vadd.f32 %v1525, 1.0
    %v1527 = vrcp.pop %v1526
    %v1528 = vmul.f32 1.0, %v1527
    %1530 = vrot.lane.b32.xlu0 %v1519, 64
    %v1531 = vpop.permute.xlu0 %1530
    %v1533 = vmul.f32 %v1528, %v1531
    %1535 = vrot.lane.b32.xlu0 %v1533, 64
    %v1536 = vpop.permute.xlu0 %1535
    %v1538 = vadd.f32 %v141, %v1536
    %v1539 = vtanh.pop %v1538
    %v1540 = vsub.f32 1.0, %v1528
    %1542 = vrot.lane.b32.xlu0 %v1539, 96
    %v1543 = vpop.permute.xlu0 %1542
    %v1545 = vmul.f32 %v1540, %v1543
    %v1547 = vmul.f32 %v1528, %v1447
    %v1548 = vadd.f32 %v1545, %v1547
    %1550 = vrot.lane.b32.xlu0 %v1548, 96
    %v1551 = vpop.permute.xlu0 %1550
    %v1553 = vsel %vm166, %v1551, %v1446
    %v1555 = vsel %vm271, %v1553, 0
    %1557 = vmatprep.subr.mxu0 0.0
    %1558 = vmatpush1.msra.mxu0 %v149
    %1559 = vmatprep.subr.mxu0 0.0
    %1560 = vmatpush1.msra.mxu0 %v150
    %1561 = vmatprep.subr.mxu0 0.0
    %1562 = vmatpush1.msra.mxu0 %v151
    %1563 = vmatprep.subr.mxu0 0.0
    %1564 = vmatpush1.msra.mxu0 %v152
    %1565 = vmatprep.subr.mxu0 0.0
    %1566 = vmatpush1.msra.mxu0 %v153
    %1567 = vmatprep.subr.mxu0 0.0
    %1568 = vmatpush1.msra.mxu0 %v154
    %1569 = vmatprep.subr.mxu0 0.0
    %1570 = vmatpush1.msra.mxu0 %v155
    %1571 = vmatprep.subr.mxu0 0.0
    %1572 = vmatpush1.msra.mxu0 %v156
    %1573 = vmatprep.subr.mxu0 0.0
    %1574 = vmatpush1.msra.mxu0 0.0
    %1575 = vmatprep.subr.mxu0 0.0
    %1576 = vmatpush1.msra.mxu0 0.0
    %1577 = vmatprep.subr.mxu0 0.0
    %1578 = vmatpush1.msra.mxu0 0.0
    %1579 = vmatprep.subr.mxu0 0.0
    %1580 = vmatpush1.msra.mxu0 0.0
    %1581 = vmatprep.subr.mxu0 0.0
    %1582 = vmatpush1.msra.mxu0 0.0
    %1583 = vmatprep.subr.mxu0 0.0
    %1584 = vmatpush1.msra.mxu0 0.0
    %1585 = vmatprep.subr.mxu0 0.0
    %1586 = vmatpush1.msra.mxu0 0.0
    %1587 = vmatprep.subr.mxu0 0.0
    %1588 = vmatpush1.msra.mxu0 0.0
    %1589 = vmatprep.subr.mxu0 0.0
    %1590 = vmatpush1.msra.mxu0 0.0
    %1591 = vmatprep.subr.mxu0 0.0
    %1592 = vmatpush1.msra.mxu0 0.0
    %1593 = vmatprep.subr.mxu0 0.0
    %1594 = vmatpush1.msra.mxu0 0.0
    %1595 = vmatprep.subr.mxu0 0.0
    %1596 = vmatpush1.msra.mxu0 0.0
    %1597 = vmatprep.subr.mxu0 0.0
    %1598 = vmatpush1.msra.mxu0 0.0
    %1599 = vmatprep.subr.mxu0 0.0
    %1600 = vmatpush1.msra.mxu0 0.0
    %1601 = vmatprep.subr.mxu0 0.0
    %1602 = vmatpush1.msra.mxu0 0.0
    %1603 = vmatprep.subr.mxu0 0.0
    %1604 = vmatpush1.msra.mxu0 0.0
    %1605 = vmatprep.subr.mxu0 0.0
    %1606 = vmatpush1.msra.mxu0 0.0
    %1607 = vmatprep.subr.mxu0 0.0
    %1608 = vmatpush1.msra.mxu0 0.0
    %1609 = vmatprep.subr.mxu0 0.0
    %1610 = vmatpush1.msra.mxu0 0.0
    %1611 = vmatprep.subr.mxu0 0.0
    %1612 = vmatpush1.msra.mxu0 0.0
    %1613 = vmatprep.subr.mxu0 0.0
    %1614 = vmatpush1.msra.mxu0 0.0
    %1615 = vmatprep.subr.mxu0 0.0
    %1616 = vmatpush1.msra.mxu0 0.0
    %1617 = vmatprep.subr.mxu0 0.0
    %1618 = vmatpush1.msra.mxu0 0.0
    %1619 = vmatprep.subr.mxu0 0.0
    %1620 = vmatpush1.msra.mxu0 0.0
    %1621 = vmatprep.mubr.f32.mxu0 0.0
    %1622 = vmatmul.mubr.f32.gmra.mrb[0].mxu0 %v1555
    %v1623 = vpop.f32.mrb[0].mxu0
    %v1624 = vadd.f32 0.0, %v1623
    %v1625 = vpop.f32.mrb[0].mxu0
    %1626 = vdwg.mxu0
    %v1627 = vadd.f32 %v1624, %v349
    %v1628 = vxor.u32 %v1627, 2147483648
    %v1629 = vmul.f32 %v1628, 1.442695
    %v1630 = vpow.pop %v1629
    %v1631 = vadd.f32 %v1630, 1.0
    %v1632 = vrcp.pop %v1631
    %v1633 = vmul.f32 1.0, %v1632
    %v1634 = vadd.f32 %v1624, %v364
    %v1635 = vadd.f32 %v1624, %v373
    %1637 = vrot.lane.b32.xlu0 %v1635, 32
    %v1638 = vpop.permute.xlu0 %1637
    %v1640 = vmul.f32 %v1633, %v1638
    %1642 = vrot.lane.b32.xlu0 %v1640, 64
    %v1643 = vpop.permute.xlu0 %1642
    %v1645 = vadd.f32 %v1634, %v1643
    %v1646 = vtanh.pop %v1645
    %v1647 = vsub.f32 1.0, %v1633
    %1649 = vrot.lane.b32.xlu0 %v1646, 96
    %v1650 = vpop.permute.xlu0 %1649
    %v1652 = vmul.f32 %v1647, %v1650
    %v1653 = vmul.f32 %v1633, %v1446
    %v1654 = vadd.f32 %v1652, %v1653
    %v1655 = vsel %vm166, %v1551, 0
    %1657 = vmatprep.subr.mxu0 0.0
    %1658 = vmatpush1.msra.mxu0 %v144
    %1659 = vmatprep.subr.mxu0 0.0
    %1660 = vmatpush1.msra.mxu0 %v145
    %1661 = vmatprep.subr.mxu0 0.0
    %1662 = vmatpush1.msra.mxu0 %v146
    %1663 = vmatprep.subr.mxu0 0.0
    %1664 = vmatpush1.msra.mxu0 %v147
    %1665 = vmatprep.subr.mxu0 0.0
    %1666 = vmatpush1.msra.mxu0 0.0
    %1667 = vmatprep.subr.mxu0 0.0
    %1668 = vmatpush1.msra.mxu0 0.0
    %1669 = vmatprep.subr.mxu0 0.0
    %1670 = vmatpush1.msra.mxu0 0.0
    %1671 = vmatprep.subr.mxu0 0.0
    %1672 = vmatpush1.msra.mxu0 0.0
    %1673 = vmatprep.subr.mxu0 0.0
    %1674 = vmatpush1.msra.mxu0 0.0
    %1675 = vmatprep.subr.mxu0 0.0
    %1676 = vmatpush1.msra.mxu0 0.0
    %1677 = vmatprep.subr.mxu0 0.0
    %1678 = vmatpush1.msra.mxu0 0.0
    %1679 = vmatprep.subr.mxu0 0.0
    %1680 = vmatpush1.msra.mxu0 0.0
    %1681 = vmatprep.subr.mxu0 0.0
    %1682 = vmatpush1.msra.mxu0 0.0
    %1683 = vmatprep.subr.mxu0 0.0
    %1684 = vmatpush1.msra.mxu0 0.0
    %1685 = vmatprep.subr.mxu0 0.0
    %1686 = vmatpush1.msra.mxu0 0.0
    %1687 = vmatprep.subr.mxu0 0.0
    %1688 = vmatpush1.msra.mxu0 0.0
    %1689 = vmatprep.subr.mxu0 0.0
    %1690 = vmatpush1.msra.mxu0 0.0
    %1691 = vmatprep.subr.mxu0 0.0
    %1692 = vmatpush1.msra.mxu0 0.0
    %1693 = vmatprep.subr.mxu0 0.0
    %1694 = vmatpush1.msra.mxu0 0.0
    %1695 = vmatprep.subr.mxu0 0.0
    %1696 = vmatpush1.msra.mxu0 0.0
    %1697 = vmatprep.subr.mxu0 0.0
    %1698 = vmatpush1.msra.mxu0 0.0
    %1699 = vmatprep.subr.mxu0 0.0
    %1700 = vmatpush1.msra.mxu0 0.0
    %1701 = vmatprep.subr.mxu0 0.0
    %1702 = vmatpush1.msra.mxu0 0.0
    %1703 = vmatprep.subr.mxu0 0.0
    %1704 = vmatpush1.msra.mxu0 0.0
    %1705 = vmatprep.subr.mxu0 0.0
    %1706 = vmatpush1.msra.mxu0 0.0
    %1707 = vmatprep.subr.mxu0 0.0
    %1708 = vmatpush1.msra.mxu0 0.0
    %1709 = vmatprep.subr.mxu0 0.0
    %1710 = vmatpush1.msra.mxu0 0.0
    %1711 = vmatprep.subr.mxu0 0.0
    %1712 = vmatpush1.msra.mxu0 0.0
    %1713 = vmatprep.subr.mxu0 0.0
    %1714 = vmatpush1.msra.mxu0 0.0
    %1715 = vmatprep.subr.mxu0 0.0
    %1716 = vmatpush1.msra.mxu0 0.0
    %1717 = vmatprep.subr.mxu0 0.0
    %1718 = vmatpush1.msra.mxu0 0.0
    %1719 = vmatprep.subr.mxu0 0.0
    %1720 = vmatpush1.msra.mxu0 0.0
    %1721 = vmatprep.mubr.f32.mxu0 0.0
    %1722 = vmatmul.mubr.f32.gmra.mrb[0].mxu0 %v1655
    %v1723 = vpop.f32.mrb[0].mxu0
    %v1724 = vadd.f32 %v164, %v1723
    %v1725 = vpop.f32.mrb[0].mxu0
    %1726 = vdwg.mxu0
    %v1728 = vrot.slane %v1724, 4
    %v1730 = vadd.f32 %v141, %v1728
    %v1731 = vxor.u32 %v1730, 2147483648
    %v1732 = vmul.f32 %v1731, 1.442695
    %v1733 = vpow.pop %v1732
    %v1734 = vadd.f32 %v1733, 1.0
    %v1735 = vrcp.pop %v1734
    %v1736 = vmul.f32 1.0, %v1735
    %1737 = vrot.lane.b32.xlu0 %v1728, 64
    %v1738 = vpop.permute.xlu0 %1737
    %v1740 = vmul.f32 %v1736, %v1738
    %1742 = vrot.lane.b32.xlu0 %v1740, 64
    %v1743 = vpop.permute.xlu0 %1742
    %v1745 = vadd.f32 %v141, %v1743
    %v1746 = vtanh.pop %v1745
    %v1747 = vsub.f32 1.0, %v1736
    %1749 = vrot.lane.b32.xlu0 %v1746, 96
    %v1750 = vpop.permute.xlu0 %1749
    %v1752 = vmul.f32 %v1747, %v1750
    %v1753 = vrot.slane %v1548, 4
    %v1755 = vmul.f32 %v1736, %v1753
    %v1756 = vadd.f32 %v1752, %v1755
    %1758 = vrot.lane.b32.xlu0 %v1756, 96
    %v1759 = vpop.permute.xlu0 %1758
    %v1762 = vrot.slane %v1654, 4
    %v1764 = vsel %vm166, %v1759, %v1762
    %v1766 = vrot.slane %v1764, 4
    %v1767 = vsel %vm271, %v1766, 0
    %1769 = vmatprep.subr.mxu0 0.0
    %1770 = vmatpush1.msra.mxu0 %v149
    %1771 = vmatprep.subr.mxu0 0.0
    %1772 = vmatpush1.msra.mxu0 %v150
    %1773 = vmatprep.subr.mxu0 0.0
    %1774 = vmatpush1.msra.mxu0 %v151
    %1775 = vmatprep.subr.mxu0 0.0
    %1776 = vmatpush1.msra.mxu0 %v152
    %1777 = vmatprep.subr.mxu0 0.0
    %1778 = vmatpush1.msra.mxu0 %v153
    %1779 = vmatprep.subr.mxu0 0.0
    %1780 = vmatpush1.msra.mxu0 %v154
    %1781 = vmatprep.subr.mxu0 0.0
    %1782 = vmatpush1.msra.mxu0 %v155
    %1783 = vmatprep.subr.mxu0 0.0
    %1784 = vmatpush1.msra.mxu0 %v156
    %1785 = vmatprep.subr.mxu0 0.0
    %1786 = vmatpush1.msra.mxu0 0.0
    %1787 = vmatprep.subr.mxu0 0.0
    %1788 = vmatpush1.msra.mxu0 0.0
    %1789 = vmatprep.subr.mxu0 0.0
    %1790 = vmatpush1.msra.mxu0 0.0
    %1791 = vmatprep.subr.mxu0 0.0
    %1792 = vmatpush1.msra.mxu0 0.0
    %1793 = vmatprep.subr.mxu0 0.0
    %1794 = vmatpush1.msra.mxu0 0.0
    %1795 = vmatprep.subr.mxu0 0.0
    %1796 = vmatpush1.msra.mxu0 0.0
    %1797 = vmatprep.subr.mxu0 0.0
    %1798 = vmatpush1.msra.mxu0 0.0
    %1799 = vmatprep.subr.mxu0 0.0
    %1800 = vmatpush1.msra.mxu0 0.0
    %1801 = vmatprep.subr.mxu0 0.0
    %1802 = vmatpush1.msra.mxu0 0.0
    %1803 = vmatprep.subr.mxu0 0.0
    %1804 = vmatpush1.msra.mxu0 0.0
    %1805 = vmatprep.subr.mxu0 0.0
    %1806 = vmatpush1.msra.mxu0 0.0
    %1807 = vmatprep.subr.mxu0 0.0
    %1808 = vmatpush1.msra.mxu0 0.0
    %1809 = vmatprep.subr.mxu0 0.0
    %1810 = vmatpush1.msra.mxu0 0.0
    %1811 = vmatprep.subr.mxu0 0.0
    %1812 = vmatpush1.msra.mxu0 0.0
    %1813 = vmatprep.subr.mxu0 0.0
    %1814 = vmatpush1.msra.mxu0 0.0
    %1815 = vmatprep.subr.mxu0 0.0
    %1816 = vmatpush1.msra.mxu0 0.0
    %1817 = vmatprep.subr.mxu0 0.0
    %1818 = vmatpush1.msra.mxu0 0.0
    %1819 = vmatprep.subr.mxu0 0.0
    %1820 = vmatpush1.msra.mxu0 0.0
    %1821 = vmatprep.subr.mxu0 0.0
    %1822 = vmatpush1.msra.mxu0 0.0
    %1823 = vmatprep.subr.mxu0 0.0
    %1824 = vmatpush1.msra.mxu0 0.0
    %1825 = vmatprep.subr.mxu0 0.0
    %1826 = vmatpush1.msra.mxu0 0.0
    %1827 = vmatprep.subr.mxu0 0.0
    %1828 = vmatpush1.msra.mxu0 0.0
    %1829 = vmatprep.subr.mxu0 0.0
    %1830 = vmatpush1.msra.mxu0 0.0
    %1831 = vmatprep.subr.mxu0 0.0
    %1832 = vmatpush1.msra.mxu0 0.0
    %1833 = vmatprep.mubr.f32.mxu0 0.0
    %1834 = vmatmul.mubr.f32.gmra.mrb[0].mxu0 %v1767
    %v1835 = vpop.f32.mrb[0].mxu0
    %v1836 = vadd.f32 0.0, %v1835
    %v1837 = vpop.f32.mrb[0].mxu0
    %1838 = vdwg.mxu0
    %v1839 = vadd.f32 %v1836, %v349
    %v1840 = vxor.u32 %v1839, 2147483648
    %v1841 = vmul.f32 %v1840, 1.442695
    %v1842 = vpow.pop %v1841
    %v1843 = vadd.f32 %v1842, 1.0
    %v1844 = vrcp.pop %v1843
    %v1845 = vmul.f32 1.0, %v1844
    %v1846 = vadd.f32 %v1836, %v364
    %v1847 = vadd.f32 %v1836, %v373
    %1849 = vrot.lane.b32.xlu0 %v1847, 32
    %v1850 = vpop.permute.xlu0 %1849
    %v1852 = vmul.f32 %v1845, %v1850
    %1854 = vrot.lane.b32.xlu0 %v1852, 64
    %v1855 = vpop.permute.xlu0 %1854
    %v1857 = vadd.f32 %v1846, %v1855
    %v1858 = vtanh.pop %v1857
    %v1859 = vsub.f32 1.0, %v1845
    %1861 = vrot.lane.b32.xlu0 %v1858, 96
    %v1862 = vpop.permute.xlu0 %1861
    %v1864 = vmul.f32 %v1859, %v1862
    %v1865 = vmul.f32 %v1845, %v1654
    %v1866 = vadd.f32 %v1864, %v1865
    %1868 = vrot.lane.b32.xlu0 %v1866, 96
    %v1869 = vpop.permute.xlu0 %1868
    %vm1871 = vcmask 257024
    %1872 = vst.msk [vmem:[#allocation2] sm:$0xf] %vm1871, %v1869
    // Predicated region
    $region38: #{feature_generator_gru.1} parent=1 // pred_check
      _
    $region39: #{feature_generator_gru.1} parent=1 // pred_check_branch
      %1874 = sbr.rel (0) target = $region41
    $region40: #{feature_generator_gru.1} parent=1 // pred_region
      %s1876 = ssub.s32 64, 64
      %1877 = vsyncadd [#allocation3], %s1876
      %s1879 = sshll.u32 [#allocation2], 4
      %s1880 = int_to_ptr.vmem [resolvable:$true] %s1879
      %1882 = dma.vmem_to_hbm [thread:$0]  %s1880, 64, %s9, [#allocation3]
    $region41: #{feature_generator_gru.1} parent=1 // pred_fallthru
      _
    // Predicated region
    $region42: #{feature_generator_gru.1} parent=1 // pred_check
      _
    $region43: #{feature_generator_gru.1} parent=1 // pred_check_branch
      %1884 = sbr.rel (0) target = $region45
    $region44: #{feature_generator_gru.1} parent=1 // pred_region
      %1885 = dma.done [#allocation3], 64
    $region45: #{feature_generator_gru.1} parent=1 // pred_fallthru
      _
    %1886 = vsyncpa [#allocation3], 1

</llo_original>
